<compile_context>
chip_gen: v7x
topology: tpu7x:2x2x1
jax: 0.10.0
libtpu: 0.0.40
codegen_flags: <defaults>
</compile_context>

<pallas_src>
import jax
import jax.numpy as jnp
from jax.experimental import pallas as pl
from jax.experimental.pallas import tpu as pltpu


def _round_up(x, m):
    return ((x + m - 1) // m) * m


def _vmem_limit_bytes():
    # Gate the scoped-VMEM limit on the actual chip (review item: keep 32 MiB
    # on v7x-class 64 MiB parts, use more of v5e/v6e's 128 MiB).
    try:
        cap = pltpu.get_tpu_info().vmem_capacity_bytes
    except Exception:
        cap = 64 * 1024 * 1024
    if cap <= 64 * 1024 * 1024:
        return 32 * 1024 * 1024
    return 96 * 1024 * 1024


# ----------------------------------------------------------------------------
# Kernel 1: conv_in(feat_s) + conv_in(feat_c) + fused AdaIN
# ----------------------------------------------------------------------------
def _make_conv_in_adain_call(N, cin, cout, Ho, Wo, S2, W2, eps=1e-5):
    # Flat-shift offsets in the phase grid (width W2 = Wo + 1).
    taps = [(kh // 2) * W2 + (kw // 2) for kh in range(3) for kw in range(3)]
    n_valid = Ho * Wo
    inv_cnt = 1.0 / n_valid
    inv_dof = 1.0 / max(n_valid - 1, 1)   # unbiased variance (torch .var())

    def kernel(w_ref, b_ref, m_ref, xs_ref, xc_ref, s_out_ref, n_out_ref):
        w = w_ref[...]                    # (9*cout, 4*cin) f32, phase-blocked
        b = b_ref[...]                    # (cout, 1)
        mask = m_ref[...]                 # (1, S2): 1.0 on valid output cols

        def conv(x):                      # x: (4*cin, S2) phases of one image
            y = jnp.dot(w, x, preferred_element_type=jnp.float32)  # (9*cout, S2)
            acc = y[0:cout, :]            # tap 0 has offset 0
            for t in range(1, 9):
                y_t = y[t * cout:(t + 1) * cout, :]
                off = taps[t]
                if off:
                    # acc[p] += y_t[p + off]  (wrap only hits pad columns)
                    y_t = pltpu.roll(y_t, S2 - off, axis=1)
                acc = acc + y_t
            return jnp.maximum(acc + b, 0.0)

        s2 = conv(xs_ref[0])              # ReLU(conv_in(feat_s))
        c2 = conv(xc_ref[0])              # ReLU(conv_in(feat_c))

        def stats(z):
            zm = z * mask
            zsum = jnp.sum(zm, axis=1, keepdims=True)
            zsq = jnp.sum(zm * zm, axis=1, keepdims=True)
            mean = zsum * inv_cnt
            var = jnp.maximum(zsq - zsum * mean, 0.0) * inv_dof  # clamped >= 0
            return mean, var

        c_mean, c_var = stats(c2)
        s_mean, s_var = stats(s2)
        scale = jnp.sqrt(s_var + eps) * jax.lax.rsqrt(c_var + eps)
        shift = s_mean - c_mean * scale

        s_out_ref[0, :, :] = s2
        n_out_ref[0, :, :] = c2 * scale + shift

    return pl.pallas_call(
        kernel,
        out_shape=(jax.ShapeDtypeStruct((N, cout, S2), jnp.float32),
                   jax.ShapeDtypeStruct((N, cout, S2), jnp.float32)),
        grid=(N,),
        in_specs=[
            pl.BlockSpec((9 * cout, 4 * cin), lambda n: (0, 0)),   # weights
            pl.BlockSpec((cout, 1), lambda n: (0, 0)),             # bias
            pl.BlockSpec((1, S2), lambda n: (0, 0)),               # valid mask
            pl.BlockSpec((1, 4 * cin, S2), lambda n: (n, 0, 0)),   # feat_s phases
            pl.BlockSpec((1, 4 * cin, S2), lambda n: (n, 0, 0)),   # feat_c phases
        ],
        out_specs=(pl.BlockSpec((1, cout, S2), lambda n: (n, 0, 0)),
                   pl.BlockSpec((1, cout, S2), lambda n: (n, 0, 0))),
        compiler_params=pltpu.CompilerParams(
            dimension_semantics=("parallel",),
            vmem_limit_bytes=_vmem_limit_bytes()),
    )


# ----------------------------------------------------------------------------
# Kernel 2: conv_out over [feat_norm | feat_adain] without the channel concat
# ----------------------------------------------------------------------------
def _make_conv_out_call(N, cn, ca, cout, S3, Wp2):
    taps = [kh * Wp2 + kw for kh in range(3) for kw in range(3)]

    def kernel(wn_ref, wa_ref, b_ref, xn_ref, xa_ref, o_ref):
        # Two channel groups, two weight blocks, one accumulator (no concat).
        y = (jnp.dot(wn_ref[...], xn_ref[0], preferred_element_type=jnp.float32) +
             jnp.dot(wa_ref[...], xa_ref[0], preferred_element_type=jnp.float32))
        acc = y[0:cout, :]                # tap 0 has offset 0
        for t in range(1, 9):
            y_t = y[t * cout:(t + 1) * cout, :]
            off = taps[t]
            if off:
                y_t = pltpu.roll(y_t, S3 - off, axis=1)
            acc = acc + y_t
        o_ref[0, :, :] = jnp.maximum(acc + b_ref[...], 0.0)

    return pl.pallas_call(
        kernel,
        out_shape=jax.ShapeDtypeStruct((N, cout, S3), jnp.float32),
        grid=(N,),
        in_specs=[
            pl.BlockSpec((9 * cout, cn), lambda n: (0, 0)),        # w_out[:, :cn]
            pl.BlockSpec((9 * cout, ca), lambda n: (0, 0)),        # w_out[:, cn:]
            pl.BlockSpec((cout, 1), lambda n: (0, 0)),             # bias
            pl.BlockSpec((1, cn, S3), lambda n: (n, 0, 0)),        # feat_norm
            pl.BlockSpec((1, ca, S3), lambda n: (n, 0, 0)),        # feat_adain
        ],
        out_specs=pl.BlockSpec((1, cout, S3), lambda n: (n, 0, 0)),
        compiler_params=pltpu.CompilerParams(
            dimension_semantics=("parallel",),
            vmem_limit_bytes=_vmem_limit_bytes()),
    )


# ----------------------------------------------------------------------------
# XLA-side layout helpers (single passes, no 9x patch blow-up)
# ----------------------------------------------------------------------------
def _phase_flatten(x, S2):
    # x: (N, C, H, W), H/W even.  2x2 space-to-depth of the zero-padded input:
    # after this, every stride-2 3x3 tap is a pure flat shift within an image.
    N, C, H, W = x.shape
    H2, W2 = H // 2 + 1, W // 2 + 1
    xp = jnp.pad(x, ((0, 0), (0, 0), (1, 1), (1, 1)))
    xr = xp.reshape(N, C, H2, 2, W2, 2)
    ph = xr.transpose(0, 3, 5, 1, 2, 4).reshape(N, 4 * C, H2 * W2)
    return jnp.pad(ph, ((0, 0), (0, 0), (0, S2 - H2 * W2)))


def _pad_flatten_s1(x, S3):
    # x: (N, C, Ho, Wo) -> zero-pad border, flatten spatial, pad lanes to S3.
    N, C, Ho, Wo = x.shape
    hp, wp = Ho + 2, Wo + 2
    xp = jnp.pad(x, ((0, 0), (0, 0), (1, 1), (1, 1)))
    xf = xp.reshape(N, C, hp * wp)
    return jnp.pad(xf, ((0, 0), (0, 0), (0, S3 - hp * wp)))


def _conv_in_weight(w_in):
    # (cout, cin, 3, 3) -> (9*cout, 4*cin).  Row t*cout+co holds tap t's
    # (cout, cin) matrix placed in its 2x2-phase column block, zeros elsewhere.
    cout, cin = w_in.shape[:2]
    w = jnp.zeros((9 * cout, 4 * cin), jnp.float32)
    for kh in range(3):
        for kw in range(3):
            t = kh * 3 + kw
            phase = (kh % 2) * 2 + (kw % 2)
            w = w.at[t * cout:(t + 1) * cout,
                     phase * cin:(phase + 1) * cin].set(w_in[:, :, kh, kw])
    return w


def _conv_out_weight(w):
    # (cout, cin, 3, 3) -> (9*cout, cin), row index = (kh*3 + kw)*cout + co.
    cout, cin = w.shape[:2]
    return jnp.transpose(w, (2, 3, 0, 1)).reshape(9 * cout, cin).astype(jnp.float32)


# ----------------------------------------------------------------------------
# SplatBlock forward
# ----------------------------------------------------------------------------
def splat_block_forward(params, feat_c, feat_s, feat_adain):
    w_in, b_in, w_out, b_out = params
    N, cin, H, W = feat_s.shape
    cout = w_in.shape[0]
    assert H % 2 == 0 and W % 2 == 0  # TODO(synk): odd spatial sizes
    Ho, Wo = H // 2, W // 2
    H2, W2 = Ho + 1, Wo + 1
    Hp2, Wp2 = Ho + 2, Wo + 2
    S2 = _round_up(H2 * W2, 128)
    S3 = _round_up(Hp2 * Wp2, 128)

    ca = feat_adain.shape[1]
    assert feat_adain.shape == (N, ca, Ho, Wo)
    assert w_out.shape[1] == cout + ca

    # --- fused conv_in(feat_s) + conv_in(feat_c) + AdaIN ---------------------
    xs = _phase_flatten(feat_s.astype(jnp.float32), S2)
    xc = _phase_flatten(feat_c.astype(jnp.float32), S2)
    w1 = _conv_in_weight(w_in.astype(jnp.float32))
    b1 = b_in.reshape(cout, 1).astype(jnp.float32)

    col = jnp.arange(S2, dtype=jnp.int32)
    mask = (((col % W2) < Wo) & (col < Ho * W2)).astype(jnp.float32).reshape(1, S2)

    s2_flat, norm_flat = _make_conv_in_adain_call(
        N, cin, cout, Ho, Wo, S2, W2)(w1, b1, mask, xs, xc)

    def _crop(y):  # (N, cout, S2) -> (N, cout, Ho, Wo)  (valid region, NCHW)
        return y[:, :, :H2 * W2].reshape(N, cout, H2, W2)[:, :, :Ho, :Wo]

    feat_s2 = _crop(s2_flat)        # returned (ReLU(conv_in(feat_s)))
    feat_norm = _crop(norm_flat)    # tiny (cout channels)

    # --- conv_out on [feat_norm | feat_adain] (no concat materialized) ------
    xn = _pad_flatten_s1(feat_norm, S3)
    xa = _pad_flatten_s1(feat_adain.astype(jnp.float32), S3)
    wn = _conv_out_weight(w_out[:, :cout])
    wa = _conv_out_weight(w_out[:, cout:])
    b2 = b_out.reshape(cout, 1).astype(jnp.float32)

    out_flat = _make_conv_out_call(N, cout, ca, cout, S3, Wp2)(wn, wa, b2, xn, xa)
    output = out_flat[:, :, :Hp2 * Wp2].reshape(N, cout, Hp2, Wp2)[:, :, :Ho, :Wo]
    return output, feat_s2


def init_params(ch_in, ch_out, key):
    k1, k2, k3, k4 = jax.random.split(key, 4)
    w_in = 0.1 * jax.random.normal(k1, (ch_out, ch_in, 3, 3), jnp.float32)
    b_in = 0.1 * jax.random.normal(k2, (ch_out,), jnp.float32)
    cin_out = ch_out * 16 + ch_out
    w_out = 0.05 * jax.random.normal(k3, (ch_out, cin_out, 3, 3), jnp.float32)
    b_out = 0.1 * jax.random.normal(k4, (ch_out,), jnp.float32)
    return w_in, b_in, w_out, b_out


# Pure-JAX reference (structural smoke check only; loose tolerance).
def _reference_forward(params, feat_c, feat_s, feat_adain):
    w_in, b_in, w_out, b_out = params

    def conv(x, w, b, stride):
        y = jax.lax.conv_general_dilated(
            x, w, window_strides=(stride, stride), padding=((1, 1), (1, 1)),
            dimension_numbers=("NCHW", "OIHW", "NCHW"),
            precision=jax.lax.Precision.HIGHEST)
        return jnp.maximum(y + b.reshape(1, -1, 1, 1), 0.0)

    def adain(content, style, eps=1e-5):
        c_mean = content.mean(axis=(2, 3), keepdims=True)
        s_mean = style.mean(axis=(2, 3), keepdims=True)
        c_var = content.var(axis=(2, 3), keepdims=True, ddof=1)
        s_var = style.var(axis=(2, 3), keepdims=True, ddof=1)
        return ((content - c_mean) / jnp.sqrt(c_var + eps) * jnp.sqrt(s_var + eps)
                + s_mean)

    fs = conv(feat_s, w_in, b_in, 2)
    fc = conv(feat_c, w_in, b_in, 2)
    fn = adain(fc, fs)
    out = conv(jnp.concatenate([fn, feat_adain], axis=1), w_out, b_out, 1)
    return out, fs


if __name__ == "__main__":
    ch_in, ch_out = 4, 4
    N, H, W = 2, 16, 16

    key = jax.random.PRNGKey(0)
    kp, kc, ks, ka = jax.random.split(key, 4)

    params = init_params(ch_in, ch_out, kp)
    feat_c = jax.random.normal(kc, (N, ch_in, H, W), jnp.float32)
    feat_s = jax.random.normal(ks, (N, ch_in, H, W), jnp.float32)
    feat_adain = jax.random.normal(ka, (N, ch_out * 16, H // 2, W // 2),
                                   jnp.float32)

    fwd = jax.jit(splat_block_forward)
    out, feat_s_out = fwd(params, feat_c, feat_s, feat_adain)
    out = jax.block_until_ready(out)
    feat_s_out = jax.block_until_ready(feat_s_out)

    assert out.shape == (N, ch_out, H // 2, W // 2), out.shape
    assert feat_s_out.shape == (N, ch_out, H // 2, W // 2), feat_s_out.shape
    assert bool(jnp.all(jnp.isfinite(out)))
    assert bool(jnp.all(jnp.isfinite(feat_s_out)))
    assert bool(jnp.all(out >= 0.0)) and bool(jnp.all(feat_s_out >= 0.0))

    # Structural smoke check vs. XLA reference (loose tol: catches wrong taps /
    # offsets / masks, not sensitive to accumulation-order differences).
    ref_out, ref_s = _reference_forward(params, feat_c, feat_s, feat_adain)
    err_out = float(jnp.max(jnp.abs(out - ref_out)))
    err_s = float(jnp.max(jnp.abs(feat_s_out - ref_s)))
    assert err_out < 5e-2 and err_s < 5e-2, (err_out, err_s)

    print("KERNEL_OK")
</pallas_src>

<mosaic_0001>
module attributes {stable_mosaic.version = 11 : i64} {
  func.func @kernel(%arg0: i32, %arg1: memref<36x16xf32, #tpu.memory_space<vmem>>, %arg2: memref<4x1xf32, #tpu.memory_space<vmem>>, %arg3: memref<1x128xf32, #tpu.memory_space<vmem>>, %arg4: memref<1x16x128xf32, #tpu.memory_space<vmem>>, %arg5: memref<1x16x128xf32, #tpu.memory_space<vmem>>, %arg6: memref<1x4x128xf32, #tpu.memory_space<vmem>>, %arg7: memref<1x4x128xf32, #tpu.memory_space<vmem>>) attributes {dimension_semantics = [#tpu.dimension_semantics<parallel>], iteration_bounds = array<i64: 2>, scalar_prefetch = 0 : i64, scratch_operands = 0 : i64, tpu.core_type = #tpu.core_type<tc>, window_params = [{pipeline_mode = #tpu.pipeline_mode<synchronous>, transform_indices = @transform_0, window_bounds = array<i64: 36, 16>}, {pipeline_mode = #tpu.pipeline_mode<synchronous>, transform_indices = @transform_1, window_bounds = array<i64: 4, 1>}, {pipeline_mode = #tpu.pipeline_mode<synchronous>, transform_indices = @transform_2, window_bounds = array<i64: 1, 128>}, {transform_indices = @transform_3, window_bounds = array<i64: 1, 16, 128>}, {transform_indices = @transform_4, window_bounds = array<i64: 1, 16, 128>}, {transform_indices = @transform_5, window_bounds = array<i64: 1, 4, 128>}, {transform_indices = @transform_6, window_bounds = array<i64: 1, 4, 128>}]} {
    %c0 = arith.constant 0 : index
    %c0_0 = arith.constant 0 : index
    %0 = vector.load %arg1[%c0, %c0_0] : memref<36x16xf32, #tpu.memory_space<vmem>>, vector<36x16xf32>
    %c0_1 = arith.constant 0 : index
    %c0_2 = arith.constant 0 : index
    %1 = vector.load %arg2[%c0_1, %c0_2] : memref<4x1xf32, #tpu.memory_space<vmem>>, vector<4x1xf32>
    %c0_3 = arith.constant 0 : index
    %c0_4 = arith.constant 0 : index
    %2 = vector.load %arg3[%c0_3, %c0_4] : memref<1x128xf32, #tpu.memory_space<vmem>>, vector<1x128xf32>
    %c0_5 = arith.constant 0 : index
    %c0_6 = arith.constant 0 : index
    %c0_7 = arith.constant 0 : index
    %3 = vector.load %arg4[%c0_5, %c0_6, %c0_7] : memref<1x16x128xf32, #tpu.memory_space<vmem>>, vector<1x16x128xf32>
    %4 = vector.shape_cast %3 : vector<1x16x128xf32> to vector<16x128xf32>
    %cst = arith.constant dense<0.000000e+00> : vector<36x128xf32>
    %5 = tpu.matmul %0, %4, %cst {dimension_numbers = #tpu.dot_dimension_numbers<[1], [0], [0], [1], [0, 0, 1, 1], [], []>} : vector<36x16xf32>, vector<16x128xf32>, vector<36x128xf32> -> vector<36x128xf32>
    %6 = vector.extract_strided_slice %5 {offsets = [0, 0], sizes = [4, 128], strides = [1, 1]} : vector<36x128xf32> to vector<4x128xf32>
    %7 = vector.extract_strided_slice %5 {offsets = [4, 0], sizes = [4, 128], strides = [1, 1]} : vector<36x128xf32> to vector<4x128xf32>
    %8 = arith.addf %6, %7 : vector<4x128xf32>
    %9 = vector.extract_strided_slice %5 {offsets = [8, 0], sizes = [4, 128], strides = [1, 1]} : vector<36x128xf32> to vector<4x128xf32>
    %c127_i32 = arith.constant 127 : i32
    %10 = tpu.dynamic_rotate %9 by %c127_i32 dim 1 : vector<4x128xf32>, i32 -> vector<4x128xf32>
    %11 = arith.addf %8, %10 : vector<4x128xf32>
    %12 = vector.extract_strided_slice %5 {offsets = [12, 0], sizes = [4, 128], strides = [1, 1]} : vector<36x128xf32> to vector<4x128xf32>
    %13 = arith.addf %11, %12 : vector<4x128xf32>
    %14 = vector.extract_strided_slice %5 {offsets = [16, 0], sizes = [4, 128], strides = [1, 1]} : vector<36x128xf32> to vector<4x128xf32>
    %15 = arith.addf %13, %14 : vector<4x128xf32>
    %16 = vector.extract_strided_slice %5 {offsets = [20, 0], sizes = [4, 128], strides = [1, 1]} : vector<36x128xf32> to vector<4x128xf32>
    %c127_i32_8 = arith.constant 127 : i32
    %17 = tpu.dynamic_rotate %16 by %c127_i32_8 dim 1 : vector<4x128xf32>, i32 -> vector<4x128xf32>
    %18 = arith.addf %15, %17 : vector<4x128xf32>
    %19 = vector.extract_strided_slice %5 {offsets = [24, 0], sizes = [4, 128], strides = [1, 1]} : vector<36x128xf32> to vector<4x128xf32>
    %c119_i32 = arith.constant 119 : i32
    %20 = tpu.dynamic_rotate %19 by %c119_i32 dim 1 : vector<4x128xf32>, i32 -> vector<4x128xf32>
    %21 = arith.addf %18, %20 : vector<4x128xf32>
    %22 = vector.extract_strided_slice %5 {offsets = [28, 0], sizes = [4, 128], strides = [1, 1]} : vector<36x128xf32> to vector<4x128xf32>
    %c119_i32_9 = arith.constant 119 : i32
    %23 = tpu.dynamic_rotate %22 by %c119_i32_9 dim 1 : vector<4x128xf32>, i32 -> vector<4x128xf32>
    %24 = arith.addf %21, %23 : vector<4x128xf32>
    %25 = vector.extract_strided_slice %5 {offsets = [32, 0], sizes = [4, 128], strides = [1, 1]} : vector<36x128xf32> to vector<4x128xf32>
    %c118_i32 = arith.constant 118 : i32
    %26 = tpu.dynamic_rotate %25 by %c118_i32 dim 1 : vector<4x128xf32>, i32 -> vector<4x128xf32>
    %27 = arith.addf %24, %26 : vector<4x128xf32>
    %28 = vector.broadcast %1 : vector<4x1xf32> to vector<4x128xf32>
    %29 = arith.addf %27, %28 : vector<4x128xf32>
    %cst_10 = arith.constant 0.000000e+00 : f32
    %30 = vector.broadcast %cst_10 : f32 to vector<4x128xf32>
    %31 = arith.maximumf %29, %30 : vector<4x128xf32>
    %c0_11 = arith.constant 0 : index
    %c0_12 = arith.constant 0 : index
    %c0_13 = arith.constant 0 : index
    %32 = vector.load %arg5[%c0_11, %c0_12, %c0_13] : memref<1x16x128xf32, #tpu.memory_space<vmem>>, vector<1x16x128xf32>
    %33 = vector.shape_cast %32 : vector<1x16x128xf32> to vector<16x128xf32>
    %cst_14 = arith.constant dense<0.000000e+00> : vector<36x128xf32>
    %34 = tpu.matmul %0, %33, %cst_14 {dimension_numbers = #tpu.dot_dimension_numbers<[1], [0], [0], [1], [0, 0, 1, 1], [], []>} : vector<36x16xf32>, vector<16x128xf32>, vector<36x128xf32> -> vector<36x128xf32>
    %35 = vector.extract_strided_slice %34 {offsets = [0, 0], sizes = [4, 128], strides = [1, 1]} : vector<36x128xf32> to vector<4x128xf32>
    %36 = vector.extract_strided_slice %34 {offsets = [4, 0], sizes = [4, 128], strides = [1, 1]} : vector<36x128xf32> to vector<4x128xf32>
    %37 = arith.addf %35, %36 : vector<4x128xf32>
    %38 = vector.extract_strided_slice %34 {offsets = [8, 0], sizes = [4, 128], strides = [1, 1]} : vector<36x128xf32> to vector<4x128xf32>
    %c127_i32_15 = arith.constant 127 : i32
    %39 = tpu.dynamic_rotate %38 by %c127_i32_15 dim 1 : vector<4x128xf32>, i32 -> vector<4x128xf32>
    %40 = arith.addf %37, %39 : vector<4x128xf32>
    %41 = vector.extract_strided_slice %34 {offsets = [12, 0], sizes = [4, 128], strides = [1, 1]} : vector<36x128xf32> to vector<4x128xf32>
    %42 = arith.addf %40, %41 : vector<4x128xf32>
    %43 = vector.extract_strided_slice %34 {offsets = [16, 0], sizes = [4, 128], strides = [1, 1]} : vector<36x128xf32> to vector<4x128xf32>
    %44 = arith.addf %42, %43 : vector<4x128xf32>
    %45 = vector.extract_strided_slice %34 {offsets = [20, 0], sizes = [4, 128], strides = [1, 1]} : vector<36x128xf32> to vector<4x128xf32>
    %c127_i32_16 = arith.constant 127 : i32
    %46 = tpu.dynamic_rotate %45 by %c127_i32_16 dim 1 : vector<4x128xf32>, i32 -> vector<4x128xf32>
    %47 = arith.addf %44, %46 : vector<4x128xf32>
    %48 = vector.extract_strided_slice %34 {offsets = [24, 0], sizes = [4, 128], strides = [1, 1]} : vector<36x128xf32> to vector<4x128xf32>
    %c119_i32_17 = arith.constant 119 : i32
    %49 = tpu.dynamic_rotate %48 by %c119_i32_17 dim 1 : vector<4x128xf32>, i32 -> vector<4x128xf32>
    %50 = arith.addf %47, %49 : vector<4x128xf32>
    %51 = vector.extract_strided_slice %34 {offsets = [28, 0], sizes = [4, 128], strides = [1, 1]} : vector<36x128xf32> to vector<4x128xf32>
    %c119_i32_18 = arith.constant 119 : i32
    %52 = tpu.dynamic_rotate %51 by %c119_i32_18 dim 1 : vector<4x128xf32>, i32 -> vector<4x128xf32>
    %53 = arith.addf %50, %52 : vector<4x128xf32>
    %54 = vector.extract_strided_slice %34 {offsets = [32, 0], sizes = [4, 128], strides = [1, 1]} : vector<36x128xf32> to vector<4x128xf32>
    %c118_i32_19 = arith.constant 118 : i32
    %55 = tpu.dynamic_rotate %54 by %c118_i32_19 dim 1 : vector<4x128xf32>, i32 -> vector<4x128xf32>
    %56 = arith.addf %53, %55 : vector<4x128xf32>
    %57 = vector.broadcast %1 : vector<4x1xf32> to vector<4x128xf32>
    %58 = arith.addf %56, %57 : vector<4x128xf32>
    %cst_20 = arith.constant 0.000000e+00 : f32
    %59 = vector.broadcast %cst_20 : f32 to vector<4x128xf32>
    %60 = arith.maximumf %58, %59 : vector<4x128xf32>
    %61 = vector.broadcast %2 : vector<1x128xf32> to vector<4x128xf32>
    %62 = arith.mulf %60, %61 : vector<4x128xf32>
    %cst_21 = arith.constant dense<0.000000e+00> : vector<4xf32>
    %63 = vector.multi_reduction <add>, %62, %cst_21 [1] : vector<4x128xf32> to vector<4xf32>
    %64 = vector.shape_cast %63 : vector<4xf32> to vector<4x1xf32>
    %65 = arith.mulf %62, %62 : vector<4x128xf32>
    %cst_22 = arith.constant dense<0.000000e+00> : vector<4xf32>
    %66 = vector.multi_reduction <add>, %65, %cst_22 [1] : vector<4x128xf32> to vector<4xf32>
    %67 = vector.shape_cast %66 : vector<4xf32> to vector<4x1xf32>
    %cst_23 = arith.constant 1.562500e-02 : f32
    %68 = vector.broadcast %cst_23 : f32 to vector<4x1xf32>
    %69 = arith.mulf %64, %68 : vector<4x1xf32>
    %70 = arith.mulf %64, %69 : vector<4x1xf32>
    %71 = arith.subf %67, %70 : vector<4x1xf32>
    %cst_24 = arith.constant 0.000000e+00 : f32
    %72 = vector.broadcast %cst_24 : f32 to vector<4x1xf32>
    %73 = arith.maximumf %71, %72 : vector<4x1xf32>
    %cst_25 = arith.constant 0.0158730168 : f32
    %74 = vector.broadcast %cst_25 : f32 to vector<4x1xf32>
    %75 = arith.mulf %73, %74 : vector<4x1xf32>
    %76 = vector.broadcast %2 : vector<1x128xf32> to vector<4x128xf32>
    %77 = arith.mulf %31, %76 : vector<4x128xf32>
    %cst_26 = arith.constant dense<0.000000e+00> : vector<4xf32>
    %78 = vector.multi_reduction <add>, %77, %cst_26 [1] : vector<4x128xf32> to vector<4xf32>
    %79 = vector.shape_cast %78 : vector<4xf32> to vector<4x1xf32>
    %80 = arith.mulf %77, %77 : vector<4x128xf32>
    %cst_27 = arith.constant dense<0.000000e+00> : vector<4xf32>
    %81 = vector.multi_reduction <add>, %80, %cst_27 [1] : vector<4x128xf32> to vector<4xf32>
    %82 = vector.shape_cast %81 : vector<4xf32> to vector<4x1xf32>
    %cst_28 = arith.constant 1.562500e-02 : f32
    %83 = vector.broadcast %cst_28 : f32 to vector<4x1xf32>
    %84 = arith.mulf %79, %83 : vector<4x1xf32>
    %85 = arith.mulf %79, %84 : vector<4x1xf32>
    %86 = arith.subf %82, %85 : vector<4x1xf32>
    %cst_29 = arith.constant 0.000000e+00 : f32
    %87 = vector.broadcast %cst_29 : f32 to vector<4x1xf32>
    %88 = arith.maximumf %86, %87 : vector<4x1xf32>
    %cst_30 = arith.constant 0.0158730168 : f32
    %89 = vector.broadcast %cst_30 : f32 to vector<4x1xf32>
    %90 = arith.mulf %88, %89 : vector<4x1xf32>
    %cst_31 = arith.constant 9.99999974E-6 : f32
    %91 = vector.broadcast %cst_31 : f32 to vector<4x1xf32>
    %92 = arith.addf %90, %91 : vector<4x1xf32>
    %93 = math.sqrt %92 : vector<4x1xf32>
    %cst_32 = arith.constant 9.99999974E-6 : f32
    %94 = vector.broadcast %cst_32 : f32 to vector<4x1xf32>
    %95 = arith.addf %75, %94 : vector<4x1xf32>
    %96 = math.rsqrt %95 : vector<4x1xf32>
    %97 = arith.mulf %93, %96 : vector<4x1xf32>
    %98 = arith.mulf %69, %97 : vector<4x1xf32>
    %99 = arith.subf %84, %98 : vector<4x1xf32>
    %c0_33 = arith.constant 0 : index
    %c0_34 = arith.constant 0 : index
    %c0_35 = arith.constant 0 : index
    %100 = vector.load %arg6[%c0_33, %c0_34, %c0_35] : memref<1x4x128xf32, #tpu.memory_space<vmem>>, vector<1x4x128xf32>
    %101 = vector.shape_cast %100 : vector<1x4x128xf32> to vector<4x128xf32>
    %102 = vector.shape_cast %31 : vector<4x128xf32> to vector<1x4x128xf32>
    tpu.vector_store %arg6[%c0_33, %c0_34, %c0_35], %102 {strides = array<i32>} : memref<1x4x128xf32, #tpu.memory_space<vmem>>, vector<1x4x128xf32>,
    %103 = vector.broadcast %97 : vector<4x1xf32> to vector<4x128xf32>
    %104 = arith.mulf %60, %103 : vector<4x128xf32>
    %105 = vector.broadcast %99 : vector<4x1xf32> to vector<4x128xf32>
    %106 = arith.addf %104, %105 : vector<4x128xf32>
    %c0_36 = arith.constant 0 : index
    %c0_37 = arith.constant 0 : index
    %c0_38 = arith.constant 0 : index
    %107 = vector.load %arg7[%c0_36, %c0_37, %c0_38] : memref<1x4x128xf32, #tpu.memory_space<vmem>>, vector<1x4x128xf32>
    %108 = vector.shape_cast %107 : vector<1x4x128xf32> to vector<4x128xf32>
    %109 = vector.shape_cast %106 : vector<4x128xf32> to vector<1x4x128xf32>
    tpu.vector_store %arg7[%c0_36, %c0_37, %c0_38], %109 {strides = array<i32>} : memref<1x4x128xf32, #tpu.memory_space<vmem>>, vector<1x4x128xf32>,
    return
  }
  func.func @transform_0(%arg0: i32) -> (i32, i32) {
    %c0_i32 = arith.constant 0 : i32
    %c0_i32_0 = arith.constant 0 : i32
    %c0_i32_1 = arith.constant 0 : i32
    return %c0_i32, %c0_i32_0 : i32, i32
  }
  func.func @transform_1(%arg0: i32) -> (i32, i32) {
    %c0_i32 = arith.constant 0 : i32
    %c0_i32_0 = arith.constant 0 : i32
    %c0_i32_1 = arith.constant 0 : i32
    return %c0_i32, %c0_i32_0 : i32, i32
  }
  func.func @transform_2(%arg0: i32) -> (i32, i32) {
    %c0_i32 = arith.constant 0 : i32
    %c0_i32_0 = arith.constant 0 : i32
    %c0_i32_1 = arith.constant 0 : i32
    return %c0_i32, %c0_i32_0 : i32, i32
  }
  func.func @transform_3(%arg0: i32) -> (i32, i32, i32) {
    %c0_i32 = arith.constant 0 : i32
    %c0_i32_0 = arith.constant 0 : i32
    %c0_i32_1 = arith.constant 0 : i32
    return %arg0, %c0_i32, %c0_i32_0 : i32, i32, i32
  }
  func.func @transform_4(%arg0: i32) -> (i32, i32, i32) {
    %c0_i32 = arith.constant 0 : i32
    %c0_i32_0 = arith.constant 0 : i32
    %c0_i32_1 = arith.constant 0 : i32
    return %arg0, %c0_i32, %c0_i32_0 : i32, i32, i32
  }
  func.func @transform_5(%arg0: i32) -> (i32, i32, i32) {
    %c0_i32 = arith.constant 0 : i32
    %c0_i32_0 = arith.constant 0 : i32
    %c0_i32_1 = arith.constant 0 : i32
    return %arg0, %c0_i32, %c0_i32_0 : i32, i32, i32
  }
  func.func @transform_6(%arg0: i32) -> (i32, i32, i32) {
    %c0_i32 = arith.constant 0 : i32
    %c0_i32_0 = arith.constant 0 : i32
    %c0_i32_1 = arith.constant 0 : i32
    return %arg0, %c0_i32, %c0_i32_0 : i32, i32, i32
  }
}

module attributes {stable_mosaic.version = 11 : i64} {
  func.func @kernel(%arg0: i32, %arg1: memref<36x4xf32, #tpu.memory_space<vmem>>, %arg2: memref<36x64xf32, #tpu.memory_space<vmem>>, %arg3: memref<4x1xf32, #tpu.memory_space<vmem>>, %arg4: memref<1x4x128xf32, #tpu.memory_space<vmem>>, %arg5: memref<1x64x128xf32, #tpu.memory_space<vmem>>, %arg6: memref<1x4x128xf32, #tpu.memory_space<vmem>>) attributes {dimension_semantics = [#tpu.dimension_semantics<parallel>], iteration_bounds = array<i64: 2>, scalar_prefetch = 0 : i64, scratch_operands = 0 : i64, tpu.core_type = #tpu.core_type<tc>, window_params = [{pipeline_mode = #tpu.pipeline_mode<synchronous>, transform_indices = @transform_0, window_bounds = array<i64: 36, 4>}, {pipeline_mode = #tpu.pipeline_mode<synchronous>, transform_indices = @transform_1, window_bounds = array<i64: 36, 64>}, {pipeline_mode = #tpu.pipeline_mode<synchronous>, transform_indices = @transform_2, window_bounds = array<i64: 4, 1>}, {transform_indices = @transform_3, window_bounds = array<i64: 1, 4, 128>}, {transform_indices = @transform_4, window_bounds = array<i64: 1, 64, 128>}, {transform_indices = @transform_5, window_bounds = array<i64: 1, 4, 128>}]} {
    %c0 = arith.constant 0 : index
    %c0_0 = arith.constant 0 : index
    %0 = vector.load %arg1[%c0, %c0_0] : memref<36x4xf32, #tpu.memory_space<vmem>>, vector<36x4xf32>
    %c0_1 = arith.constant 0 : index
    %c0_2 = arith.constant 0 : index
    %c0_3 = arith.constant 0 : index
    %1 = vector.load %arg4[%c0_1, %c0_2, %c0_3] : memref<1x4x128xf32, #tpu.memory_space<vmem>>, vector<1x4x128xf32>
    %2 = vector.shape_cast %1 : vector<1x4x128xf32> to vector<4x128xf32>
    %cst = arith.constant dense<0.000000e+00> : vector<36x128xf32>
    %3 = tpu.matmul %0, %2, %cst {dimension_numbers = #tpu.dot_dimension_numbers<[1], [0], [0], [1], [0, 0, 1, 1], [], []>} : vector<36x4xf32>, vector<4x128xf32>, vector<36x128xf32> -> vector<36x128xf32>
    %c0_4 = arith.constant 0 : index
    %c0_5 = arith.constant 0 : index
    %4 = vector.load %arg2[%c0_4, %c0_5] : memref<36x64xf32, #tpu.memory_space<vmem>>, vector<36x64xf32>
    %c0_6 = arith.constant 0 : index
    %c0_7 = arith.constant 0 : index
    %c0_8 = arith.constant 0 : index
    %5 = vector.load %arg5[%c0_6, %c0_7, %c0_8] : memref<1x64x128xf32, #tpu.memory_space<vmem>>, vector<1x64x128xf32>
    %6 = vector.shape_cast %5 : vector<1x64x128xf32> to vector<64x128xf32>
    %cst_9 = arith.constant dense<0.000000e+00> : vector<36x128xf32>
    %7 = tpu.matmul %4, %6, %cst_9 {dimension_numbers = #tpu.dot_dimension_numbers<[1], [0], [0], [1], [0, 0, 1, 1], [], []>} : vector<36x64xf32>, vector<64x128xf32>, vector<36x128xf32> -> vector<36x128xf32>
    %8 = arith.addf %3, %7 : vector<36x128xf32>
    %9 = vector.extract_strided_slice %8 {offsets = [0, 0], sizes = [4, 128], strides = [1, 1]} : vector<36x128xf32> to vector<4x128xf32>
    %10 = vector.extract_strided_slice %8 {offsets = [4, 0], sizes = [4, 128], strides = [1, 1]} : vector<36x128xf32> to vector<4x128xf32>
    %c127_i32 = arith.constant 127 : i32
    %11 = tpu.dynamic_rotate %10 by %c127_i32 dim 1 : vector<4x128xf32>, i32 -> vector<4x128xf32>
    %12 = arith.addf %9, %11 : vector<4x128xf32>
    %13 = vector.extract_strided_slice %8 {offsets = [8, 0], sizes = [4, 128], strides = [1, 1]} : vector<36x128xf32> to vector<4x128xf32>
    %c126_i32 = arith.constant 126 : i32
    %14 = tpu.dynamic_rotate %13 by %c126_i32 dim 1 : vector<4x128xf32>, i32 -> vector<4x128xf32>
    %15 = arith.addf %12, %14 : vector<4x128xf32>
    %16 = vector.extract_strided_slice %8 {offsets = [12, 0], sizes = [4, 128], strides = [1, 1]} : vector<36x128xf32> to vector<4x128xf32>
    %c118_i32 = arith.constant 118 : i32
    %17 = tpu.dynamic_rotate %16 by %c118_i32 dim 1 : vector<4x128xf32>, i32 -> vector<4x128xf32>
    %18 = arith.addf %15, %17 : vector<4x128xf32>
    %19 = vector.extract_strided_slice %8 {offsets = [16, 0], sizes = [4, 128], strides = [1, 1]} : vector<36x128xf32> to vector<4x128xf32>
    %c117_i32 = arith.constant 117 : i32
    %20 = tpu.dynamic_rotate %19 by %c117_i32 dim 1 : vector<4x128xf32>, i32 -> vector<4x128xf32>
    %21 = arith.addf %18, %20 : vector<4x128xf32>
    %22 = vector.extract_strided_slice %8 {offsets = [20, 0], sizes = [4, 128], strides = [1, 1]} : vector<36x128xf32> to vector<4x128xf32>
    %c116_i32 = arith.constant 116 : i32
    %23 = tpu.dynamic_rotate %22 by %c116_i32 dim 1 : vector<4x128xf32>, i32 -> vector<4x128xf32>
    %24 = arith.addf %21, %23 : vector<4x128xf32>
    %25 = vector.extract_strided_slice %8 {offsets = [24, 0], sizes = [4, 128], strides = [1, 1]} : vector<36x128xf32> to vector<4x128xf32>
    %c108_i32 = arith.constant 108 : i32
    %26 = tpu.dynamic_rotate %25 by %c108_i32 dim 1 : vector<4x128xf32>, i32 -> vector<4x128xf32>
    %27 = arith.addf %24, %26 : vector<4x128xf32>
    %28 = vector.extract_strided_slice %8 {offsets = [28, 0], sizes = [4, 128], strides = [1, 1]} : vector<36x128xf32> to vector<4x128xf32>
    %c107_i32 = arith.constant 107 : i32
    %29 = tpu.dynamic_rotate %28 by %c107_i32 dim 1 : vector<4x128xf32>, i32 -> vector<4x128xf32>
    %30 = arith.addf %27, %29 : vector<4x128xf32>
    %31 = vector.extract_strided_slice %8 {offsets = [32, 0], sizes = [4, 128], strides = [1, 1]} : vector<36x128xf32> to vector<4x128xf32>
    %c106_i32 = arith.constant 106 : i32
    %32 = tpu.dynamic_rotate %31 by %c106_i32 dim 1 : vector<4x128xf32>, i32 -> vector<4x128xf32>
    %33 = arith.addf %30, %32 : vector<4x128xf32>
    %c0_10 = arith.constant 0 : index
    %c0_11 = arith.constant 0 : index
    %34 = vector.load %arg3[%c0_10, %c0_11] : memref<4x1xf32, #tpu.memory_space<vmem>>, vector<4x1xf32>
    %35 = vector.broadcast %34 : vector<4x1xf32> to vector<4x128xf32>
    %36 = arith.addf %33, %35 : vector<4x128xf32>
    %cst_12 = arith.constant 0.000000e+00 : f32
    %37 = vector.broadcast %cst_12 : f32 to vector<4x128xf32>
    %38 = arith.maximumf %36, %37 : vector<4x128xf32>
    %c0_13 = arith.constant 0 : index
    %c0_14 = arith.constant 0 : index
    %c0_15 = arith.constant 0 : index
    %39 = vector.load %arg6[%c0_13, %c0_14, %c0_15] : memref<1x4x128xf32, #tpu.memory_space<vmem>>, vector<1x4x128xf32>
    %40 = vector.shape_cast %39 : vector<1x4x128xf32> to vector<4x128xf32>
    %41 = vector.shape_cast %38 : vector<4x128xf32> to vector<1x4x128xf32>
    tpu.vector_store %arg6[%c0_13, %c0_14, %c0_15], %41 {strides = array<i32>} : memref<1x4x128xf32, #tpu.memory_space<vmem>>, vector<1x4x128xf32>,
    return
  }
  func.func @transform_0(%arg0: i32) -> (i32, i32) {
    %c0_i32 = arith.constant 0 : i32
    %c0_i32_0 = arith.constant 0 : i32
    %c0_i32_1 = arith.constant 0 : i32
    return %c0_i32, %c0_i32_0 : i32, i32
  }
  func.func @transform_1(%arg0: i32) -> (i32, i32) {
    %c0_i32 = arith.constant 0 : i32
    %c0_i32_0 = arith.constant 0 : i32
    %c0_i32_1 = arith.constant 0 : i32
    return %c0_i32, %c0_i32_0 : i32, i32
  }
  func.func @transform_2(%arg0: i32) -> (i32, i32) {
    %c0_i32 = arith.constant 0 : i32
    %c0_i32_0 = arith.constant 0 : i32
    %c0_i32_1 = arith.constant 0 : i32
    return %c0_i32, %c0_i32_0 : i32, i32
  }
  func.func @transform_3(%arg0: i32) -> (i32, i32, i32) {
    %c0_i32 = arith.constant 0 : i32
    %c0_i32_0 = arith.constant 0 : i32
    %c0_i32_1 = arith.constant 0 : i32
    return %arg0, %c0_i32, %c0_i32_0 : i32, i32, i32
  }
  func.func @transform_4(%arg0: i32) -> (i32, i32, i32) {
    %c0_i32 = arith.constant 0 : i32
    %c0_i32_0 = arith.constant 0 : i32
    %c0_i32_1 = arith.constant 0 : i32
    return %arg0, %c0_i32, %c0_i32_0 : i32, i32, i32
  }
  func.func @transform_5(%arg0: i32) -> (i32, i32, i32) {
    %c0_i32 = arith.constant 0 : i32
    %c0_i32_0 = arith.constant 0 : i32
    %c0_i32_1 = arith.constant 0 : i32
    return %arg0, %c0_i32, %c0_i32_0 : i32, i32, i32
  }
}

</mosaic_0001>

<llo_original>
// kernel: splat_block_forward.2
$region0: #{splat_block_forward.2}
  #allocation0 [shape = 'u32[]', space=smem, size = 0x4, offset = 0x4, fixed_abs, tag = 'smem constant byte address 0x4 - core index']
  #allocation1 [shape = 'u32[144,128]{1,0:T(1,128)}', space=vmem, size = 0x12000, scoped, tag = 'internal scratch']
  %s0 = inlined_call_operand.vmem [shape: f32[36,16], index: 0, kind: input, shape index: {}]
  %s1 = inlined_call_operand.vmem [shape: f32[4,1], index: 1, kind: input, shape index: {}]
  %s2 = inlined_call_operand.vmem [shape: f32[1,128], index: 2, kind: input, shape index: {}]
  %s3 = inlined_call_operand.vmem [shape: f32[2,16,128], index: 3, kind: input, shape index: {}]
  %s4 = inlined_call_operand.vmem [shape: f32[2,16,128], index: 4, kind: input, shape index: {}]
  %s5 = inlined_call_operand.vmem [shape: f32[2,4,128], index: 5, kind: output, shape index: {0}]
  %s6 = inlined_call_operand.vmem [shape: f32[2,4,128], index: 6, kind: output, shape index: {1}]
  %7 = xla_tuple %s5, %s6
  %s8 = sld [smem:[#allocation0]]
  $region61: #{splat_block_forward.2} parent=0
    _
  %s10 = ssub.s32 1, %s8
  %s11 = scalar_select 0, %s10, %s8
  loop: start=0, step=1, limit=4
  $region2: #{splat_block_forward.2} parent=0 // loop_pre_header
    _
  $region3: #{splat_block_forward.2} parent=0 // loop_header
    %s13 = sphi 0, %s17
    %p14 = scmp.ge.s32.totalorder %s13, 4
    %s21 = sphi 0, %s21
    %s23 = sphi 0, %s21
    %s24 = sphi 0, %s23
    %s38 = sphi 0, %s24
    %s42 = sphi 0, %s42
    %s44 = sphi 0, %s42
    %s45 = sphi 0, %s44
    %s59 = sphi 0, %s45
    %s63 = sphi 0, %s63
    %s65 = sphi 0, %s63
    %s66 = sphi 0, %s65
    %s80 = sphi 0, %s66
    %s86 = sphi 0, %s88
    %s89 = sphi 0, %s86
    %s90 = sphi 0, %s89
    %s106 = sphi 0, %s90
    %s112 = sphi 0, %s114
    %s115 = sphi 0, %s112
    %s116 = sphi 0, %s115
    %s132 = sphi 0, %s116
    %s138 = sphi 0, %s140
    %s141 = sphi 0, %s138
    %s142 = sphi 0, %s141
    %s158 = sphi 0, %s142
    %s164 = sphi 0, %s166
    %s167 = sphi 0, %s164
    %s168 = sphi 0, %s167
    %s184 = sphi 0, %s168
  $region4: #{splat_block_forward.2} parent=0 // loop_header_branch
    %16 = sbr.rel (%p14) target = $region8
  $region5: #{splat_block_forward.2} parent=0 // loop_body
    %s18 = ssub.s32 %s13, 1
    %s19 = ssub.s32 %s13, 2
    %s20 = sadd.s32 %s13, 1
    %s22 = sadd.s32 %s21, 1
    %p25 = scmp.eq.s32.totalorder %s13, 1
    %p26 = scmp.ne.s32.totalorder %s21, %s23
    %p27 = scmp.eq.s32.totalorder %s13, 0
    %p28 = por %p26, %p27
    %p29 = scmp.ne.s32.totalorder %s21, %s23
    %p30 = scmp.eq.s32.totalorder %s18, 1
    %p31 = por %p29, %p30
    %p32 = scmp.ne.s32.totalorder %s23, %s24
    %p33 = scmp.eq.s32.totalorder %s18, 0
    %p34 = por %p32, %p33
    %p35 = scmp.ne.s32.totalorder %s23, %s24
    %p36 = scmp.eq.s32.totalorder %s19, 1
    %p37 = por %p35, %p36
    %p39 = scmp.ne.s32.totalorder %s24, %s38
    %p40 = scmp.eq.s32.totalorder %s19, 0
    %p41 = por %p39, %p40
    %s43 = sadd.s32 %s42, 1
    %p46 = scmp.eq.s32.totalorder %s13, 1
    %p47 = scmp.ne.s32.totalorder %s42, %s44
    %p48 = scmp.eq.s32.totalorder %s13, 0
    %p49 = por %p47, %p48
    %p50 = scmp.ne.s32.totalorder %s42, %s44
    %p51 = scmp.eq.s32.totalorder %s18, 1
    %p52 = por %p50, %p51
    %p53 = scmp.ne.s32.totalorder %s44, %s45
    %p54 = scmp.eq.s32.totalorder %s18, 0
    %p55 = por %p53, %p54
    %p56 = scmp.ne.s32.totalorder %s44, %s45
    %p57 = scmp.eq.s32.totalorder %s19, 1
    %p58 = por %p56, %p57
    %p60 = scmp.ne.s32.totalorder %s45, %s59
    %p61 = scmp.eq.s32.totalorder %s19, 0
    %p62 = por %p60, %p61
    %s64 = sadd.s32 %s63, 1
    %p67 = scmp.eq.s32.totalorder %s13, 1
    %p68 = scmp.ne.s32.totalorder %s63, %s65
    %p69 = scmp.eq.s32.totalorder %s13, 0
    %p70 = por %p68, %p69
    %p71 = scmp.ne.s32.totalorder %s63, %s65
    %p72 = scmp.eq.s32.totalorder %s18, 1
    %p73 = por %p71, %p72
    %p74 = scmp.ne.s32.totalorder %s65, %s66
    %p75 = scmp.eq.s32.totalorder %s18, 0
    %p76 = por %p74, %p75
    %p77 = scmp.ne.s32.totalorder %s65, %s66
    %p78 = scmp.eq.s32.totalorder %s19, 1
    %p79 = por %p77, %p78
    %p81 = scmp.ne.s32.totalorder %s66, %s80
    %p82 = scmp.eq.s32.totalorder %s19, 0
    %p83 = por %p81, %p82
    %s84 = ssub.s32 %s13, %s20
    %p85 = scmp.eq.s32.totalorder %s84, 0
    %s87 = sadd.s32 %s86, 1
    %s88 = scalar_select %p85, %s86, %s87
    %p91 = pneg %p85
    %p92 = scmp.eq.s32.totalorder %s13, 1
    %p93 = por %p91, %p92
    %p94 = scmp.ne.s32.totalorder %s86, %s89
    %p95 = scmp.eq.s32.totalorder %s13, 0
    %p96 = por %p94, %p95
    %p97 = scmp.ne.s32.totalorder %s86, %s89
    %p98 = scmp.eq.s32.totalorder %s18, 1
    %p99 = por %p97, %p98
    %p100 = scmp.ne.s32.totalorder %s89, %s90
    %p101 = scmp.eq.s32.totalorder %s18, 0
    %p102 = por %p100, %p101
    %p103 = scmp.ne.s32.totalorder %s89, %s90
    %p104 = scmp.eq.s32.totalorder %s19, 1
    %p105 = por %p103, %p104
    %p107 = scmp.ne.s32.totalorder %s90, %s106
    %p108 = scmp.eq.s32.totalorder %s19, 0
    %p109 = por %p107, %p108
    %s110 = ssub.s32 %s13, %s20
    %p111 = scmp.eq.s32.totalorder %s110, 0
    %s113 = sadd.s32 %s112, 1
    %s114 = scalar_select %p111, %s112, %s113
    %p117 = pneg %p111
    %p118 = scmp.eq.s32.totalorder %s13, 1
    %p119 = por %p117, %p118
    %p120 = scmp.ne.s32.totalorder %s112, %s115
    %p121 = scmp.eq.s32.totalorder %s13, 0
    %p122 = por %p120, %p121
    %p123 = scmp.ne.s32.totalorder %s112, %s115
    %p124 = scmp.eq.s32.totalorder %s18, 1
    %p125 = por %p123, %p124
    %p126 = scmp.ne.s32.totalorder %s115, %s116
    %p127 = scmp.eq.s32.totalorder %s18, 0
    %p128 = por %p126, %p127
    %p129 = scmp.ne.s32.totalorder %s115, %s116
    %p130 = scmp.eq.s32.totalorder %s19, 1
    %p131 = por %p129, %p130
    %p133 = scmp.ne.s32.totalorder %s116, %s132
    %p134 = scmp.eq.s32.totalorder %s19, 0
    %p135 = por %p133, %p134
    %s136 = ssub.s32 %s13, %s20
    %p137 = scmp.eq.s32.totalorder %s136, 0
    %s139 = sadd.s32 %s138, 1
    %s140 = scalar_select %p137, %s138, %s139
    %p143 = pneg %p137
    %p144 = scmp.eq.s32.totalorder %s13, 1
    %p145 = por %p143, %p144
    %p146 = scmp.ne.s32.totalorder %s138, %s141
    %p147 = scmp.eq.s32.totalorder %s13, 0
    %p148 = por %p146, %p147
    %p149 = scmp.ne.s32.totalorder %s138, %s141
    %p150 = scmp.eq.s32.totalorder %s18, 1
    %p151 = por %p149, %p150
    %p152 = scmp.ne.s32.totalorder %s141, %s142
    %p153 = scmp.eq.s32.totalorder %s18, 0
    %p154 = por %p152, %p153
    %p155 = scmp.ne.s32.totalorder %s141, %s142
    %p156 = scmp.eq.s32.totalorder %s19, 1
    %p157 = por %p155, %p156
    %p159 = scmp.ne.s32.totalorder %s142, %s158
    %p160 = scmp.eq.s32.totalorder %s19, 0
    %p161 = por %p159, %p160
    %s162 = ssub.s32 %s13, %s20
    %p163 = scmp.eq.s32.totalorder %s162, 0
    %s165 = sadd.s32 %s164, 1
    %s166 = scalar_select %p163, %s164, %s165
    %p169 = pneg %p163
    %p170 = scmp.eq.s32.totalorder %s13, 1
    %p171 = por %p169, %p170
    %p172 = scmp.ne.s32.totalorder %s164, %s167
    %p173 = scmp.eq.s32.totalorder %s13, 0
    %p174 = por %p172, %p173
    %p175 = scmp.ne.s32.totalorder %s164, %s167
    %p176 = scmp.eq.s32.totalorder %s18, 1
    %p177 = por %p175, %p176
    %p178 = scmp.ne.s32.totalorder %s167, %s168
    %p179 = scmp.eq.s32.totalorder %s18, 0
    %p180 = por %p178, %p179
    %p181 = scmp.ne.s32.totalorder %s167, %s168
    %p182 = scmp.eq.s32.totalorder %s19, 1
    %p183 = por %p181, %p182
    %p185 = scmp.ne.s32.totalorder %s168, %s184
    %p186 = scmp.eq.s32.totalorder %s19, 0
    %p187 = por %p185, %p186
    %p188 = scmp.le.s32.totalorder 1, %s13
    %p189 = scmp.lt.s32.totalorder %s13, 3
    %p190 = pnand %p188, %p189
    %p191 = pneg %p190
    // Predicated region
    $region9: #{splat_block_forward.2} parent=5 // pred_check
      _
    $region10: #{splat_block_forward.2} parent=5 // pred_check_branch
      %193 = sbr.rel (%p190) target = $region12
    $region11: #{splat_block_forward.2} parent=5 // pred_region
      %s194 = ssub.s32 %s13, 1
      // Predicated region
      $region13: #{splat_block_forward.2} parent=11 // pred_check
        %p195 = pneg %p34
      $region14: #{splat_block_forward.2} parent=11 // pred_check_branch
        %197 = sbr.rel (%p195) target = $region16
      $region15: #{splat_block_forward.2} parent=11 // pred_region
        _
      $region16: #{splat_block_forward.2} parent=11 // pred_fallthru
        _
      // Predicated region
      $region17: #{splat_block_forward.2} parent=11 // pred_check
        %p198 = pneg %p55
      $region18: #{splat_block_forward.2} parent=11 // pred_check_branch
        %200 = sbr.rel (%p198) target = $region20
      $region19: #{splat_block_forward.2} parent=11 // pred_region
        _
      $region20: #{splat_block_forward.2} parent=11 // pred_fallthru
        _
      // Predicated region
      $region21: #{splat_block_forward.2} parent=11 // pred_check
        %p201 = pneg %p76
      $region22: #{splat_block_forward.2} parent=11 // pred_check_branch
        %203 = sbr.rel (%p201) target = $region24
      $region23: #{splat_block_forward.2} parent=11 // pred_region
        _
      $region24: #{splat_block_forward.2} parent=11 // pred_fallthru
        _
    $region12: #{splat_block_forward.2} parent=5 // pred_fallthru
      _
    %p204 = scmp.lt.s32.totalorder %s13, 2
    // Predicated region
    $region25: #{splat_block_forward.2} parent=5 // pred_check
      %p205 = pneg %p204
    $region26: #{splat_block_forward.2} parent=5 // pred_check_branch
      %207 = sbr.rel (%p205) target = $region28
    $region27: #{splat_block_forward.2} parent=5 // pred_region
      // Predicated region
      $region29: #{splat_block_forward.2} parent=27 // pred_check
        %p208 = pneg %p96
      $region30: #{splat_block_forward.2} parent=27 // pred_check_branch
        %210 = sbr.rel (%p208) target = $region32
      $region31: #{splat_block_forward.2} parent=27 // pred_region
        %p211 = scmp.lt.s32.totalorder %s13, 1
        %s212 = scalar_select %p211, %s13, 1
        %s213 = smul.addr %s212, 2
        %s214 = smul.addr %s213, 8
        %s215 = scalar_lea.vmem %s3, %s214
      $region32: #{splat_block_forward.2} parent=27 // pred_fallthru
        _
      // Predicated region
      $region33: #{splat_block_forward.2} parent=27 // pred_check
        %p216 = pneg %p122
      $region34: #{splat_block_forward.2} parent=27 // pred_check_branch
        %218 = sbr.rel (%p216) target = $region36
      $region35: #{splat_block_forward.2} parent=27 // pred_region
        %p219 = scmp.lt.s32.totalorder %s13, 1
        %s220 = scalar_select %p219, %s13, 1
        %s221 = smul.addr %s220, 2
        %s222 = smul.addr %s221, 8
        %s223 = scalar_lea.vmem %s4, %s222
      $region36: #{splat_block_forward.2} parent=27 // pred_fallthru
        _
    $region28: #{splat_block_forward.2} parent=5 // pred_fallthru
      _
    %p224 = scmp.le.s32.totalorder 1, %s13
    %p225 = scmp.lt.s32.totalorder %s13, 3
    %p226 = pnand %p224, %p225
    %p227 = pneg %p226
    // Predicated region
    $region37: #{splat_block_forward.2} parent=5 // pred_check
      _
    $region38: #{splat_block_forward.2} parent=5 // pred_check_branch
      %229 = sbr.rel (%p226) target = $region40
    $region39: #{splat_block_forward.2} parent=5 // pred_region
      %s230 = ssub.s32 %s13, 1
      %p231 = pneg %p34
      %p232 = pneg %p31
      %p233 = pneg %p55
      %p234 = pneg %p52
      %p235 = pneg %p76
      %p236 = pneg %p73
      %p237 = scmp.lt.s32.totalorder %s18, 1
      %s238 = scalar_select %p237, %s18, 1
      %s239 = smul.addr %s238, 2
      %s240 = smul.addr %s239, 8
      %s241 = scalar_lea.vmem %s3, %s240
      %p242 = pneg %p102
      %p243 = pneg %p99
      %p244 = scmp.lt.s32.totalorder %s18, 1
      %s245 = scalar_select %p244, %s18, 1
      %s246 = smul.addr %s245, 2
      %s247 = smul.addr %s246, 8
      %s248 = scalar_lea.vmem %s4, %s247
      %p249 = pneg %p128
      %p250 = pneg %p125
      %p251 = pneg %p154
      %p252 = pneg %p151
      %p253 = scmp.lt.s32.totalorder %s18, 1
      %s254 = scalar_select %p253, %s18, 1
      %s255 = smul.addr %s254, 4
      %s256 = scalar_lea.vmem %s5, %s255
      %p257 = pneg %p180
      %p258 = pneg %p177
      %p259 = scmp.lt.s32.totalorder %s18, 1
      %s260 = scalar_select %p259, %s18, 1
      %s261 = smul.addr %s260, 4
      %s262 = scalar_lea.vmem %s6, %s261
      %p263 = scmp.lt.s32.totalorder %s18, 1
      %s264 = scalar_select %p263, %s18, 1
      %s265 = smul.addr %s264, 2
      %s266 = smul.addr %s265, 8
      %s267 = scalar_lea.vmem %s3, %s266
      %p268 = scmp.lt.s32.totalorder %s18, 1
      %s269 = scalar_select %p268, %s18, 1
      %s270 = smul.addr %s269, 2
      %s271 = smul.addr %s270, 8
      %s272 = scalar_lea.vmem %s4, %s271
      %p273 = scmp.lt.s32.totalorder %s18, 1
      %s274 = scalar_select %p273, %s18, 1
      %s275 = smul.addr %s274, 4
      %s276 = scalar_lea.vmem %s5, %s275
      %p277 = scmp.lt.s32.totalorder %s18, 1
      %s278 = scalar_select %p277, %s18, 1
      %s279 = smul.addr %s278, 4
      %s280 = scalar_lea.vmem %s6, %s279
      %v281 = vld [vmem:[%s0] sm:$0xff]
      %v282 = vld [vmem:[%s0 + $0x8] sm:$0xff]
      %v283 = vld [vmem:[%s0 + $0x10] sm:$0xff]
      %v284 = vld [vmem:[%s0 + $0x18] sm:$0xff]
      %v285 = vld [vmem:[%s0 + $0x20] sm:$0xf]
      %v286 = vld [vmem:[%s1] sm:$0xf]
      %v287 = vld [vmem:[%s2] sm:$0x1]
      %v288 = vld [vmem:[%s267] sm:$0xff]
      %v289 = vld [vmem:[%s267 + $0x8] sm:$0xff]
      %vm290 = vcmask 130048
      %v292 = vsel %vm290, %v281, 0
      %v295 = vsel %vm290, %v282, 0
      %v298 = vsel %vm290, %v283, 0
      %v301 = vsel %vm290, %v284, 0
      %v304 = vsel %vm290, %v285, 0
      %306 = vmatprep.subr.mxu0 0.0
      %307 = vmatpush1.msra.mxu0 %v288
      %308 = vmatprep.subr.mxu0 0.0
      %309 = vmatpush1.msra.mxu0 %v289
      %310 = vmatprep.subr.mxu0 0.0
      %311 = vmatpush1.msra.mxu0 0.0
      %312 = vmatprep.subr.mxu0 0.0
      %313 = vmatpush1.msra.mxu0 0.0
      %314 = vmatprep.subr.mxu0 0.0
      %315 = vmatpush1.msra.mxu0 0.0
      %316 = vmatprep.subr.mxu0 0.0
      %317 = vmatpush1.msra.mxu0 0.0
      %318 = vmatprep.subr.mxu0 0.0
      %319 = vmatpush1.msra.mxu0 0.0
      %320 = vmatprep.subr.mxu0 0.0
      %321 = vmatpush1.msra.mxu0 0.0
      %322 = vmatprep.subr.mxu0 0.0
      %323 = vmatpush1.msra.mxu0 0.0
      %324 = vmatprep.subr.mxu0 0.0
      %325 = vmatpush1.msra.mxu0 0.0
      %326 = vmatprep.subr.mxu0 0.0
      %327 = vmatpush1.msra.mxu0 0.0
      %328 = vmatprep.subr.mxu0 0.0
      %329 = vmatpush1.msra.mxu0 0.0
      %330 = vmatprep.subr.mxu0 0.0
      %331 = vmatpush1.msra.mxu0 0.0
      %332 = vmatprep.subr.mxu0 0.0
      %333 = vmatpush1.msra.mxu0 0.0
      %334 = vmatprep.subr.mxu0 0.0
      %335 = vmatpush1.msra.mxu0 0.0
      %336 = vmatprep.subr.mxu0 0.0
      %337 = vmatpush1.msra.mxu0 0.0
      %338 = vmatprep.subr.mxu0 0.0
      %339 = vmatpush1.msra.mxu0 0.0
      %340 = vmatprep.subr.mxu0 0.0
      %341 = vmatpush1.msra.mxu0 0.0
      %342 = vmatprep.subr.mxu0 0.0
      %343 = vmatpush1.msra.mxu0 0.0
      %344 = vmatprep.subr.mxu0 0.0
      %345 = vmatpush1.msra.mxu0 0.0
      %346 = vmatprep.subr.mxu0 0.0
      %347 = vmatpush1.msra.mxu0 0.0
      %348 = vmatprep.subr.mxu0 0.0
      %349 = vmatpush1.msra.mxu0 0.0
      %350 = vmatprep.subr.mxu0 0.0
      %351 = vmatpush1.msra.mxu0 0.0
      %352 = vmatprep.subr.mxu0 0.0
      %353 = vmatpush1.msra.mxu0 0.0
      %354 = vmatprep.subr.mxu0 0.0
      %355 = vmatpush1.msra.mxu0 0.0
      %356 = vmatprep.subr.mxu0 0.0
      %357 = vmatpush1.msra.mxu0 0.0
      %358 = vmatprep.subr.mxu0 0.0
      %359 = vmatpush1.msra.mxu0 0.0
      %360 = vmatprep.subr.mxu0 0.0
      %361 = vmatpush1.msra.mxu0 0.0
      %362 = vmatprep.subr.mxu0 0.0
      %363 = vmatpush1.msra.mxu0 0.0
      %364 = vmatprep.subr.mxu0 0.0
      %365 = vmatpush1.msra.mxu0 0.0
      %366 = vmatprep.subr.mxu0 0.0
      %367 = vmatpush1.msra.mxu0 0.0
      %368 = vmatprep.subr.mxu0 0.0
      %369 = vmatpush1.msra.mxu0 0.0
      %370 = vmatprep.mubr.f32.mxu0 0.0
      %371 = vmatmul.mubr.f32.gmra.mrb[0].mxu0 %v292
      %v372 = vpop.f32.mrb[0].mxu0
      %v373 = vadd.f32 0.0, %v372
      %v374 = vpop.f32.mrb[0].mxu0
      %375 = vmatprep.mubr.f32.mxu0 0.0
      %376 = vmatmul.mubr.f32.gmra.mrb[0].mxu0 %v295
      %v377 = vpop.f32.mrb[0].mxu0
      %v378 = vadd.f32 0.0, %v377
      %v379 = vpop.f32.mrb[0].mxu0
      %380 = vmatprep.mubr.f32.mxu0 0.0
      %381 = vmatmul.mubr.f32.gmra.mrb[0].mxu0 %v298
      %v382 = vpop.f32.mrb[0].mxu0
      %v383 = vadd.f32 0.0, %v382
      %v384 = vpop.f32.mrb[0].mxu0
      %385 = vmatprep.mubr.f32.mxu0 0.0
      %386 = vmatmul.mubr.f32.gmra.mrb[0].mxu0 %v301
      %v387 = vpop.f32.mrb[0].mxu0
      %v388 = vadd.f32 0.0, %v387
      %v389 = vpop.f32.mrb[0].mxu0
      %390 = vmatprep.mubr.f32.mxu0 0.0
      %391 = vmatmul.mubr.f32.gmra.mrb[0].mxu0 %v304
      %v392 = vpop.f32.mrb[0].mxu0
      %v393 = vadd.f32 0.0, %v392
      %v394 = vpop.f32.mrb[0].mxu0
      %395 = vdwg.mxu0
      %v397 = vrot.slane %v373, 4
      %v399 = vadd.f32 %v373, %v397
      %400 = vrot.lane.b32.xlu0 %v378, 127
      %v401 = vpop.permute.xlu0 %400
      %v402 = vadd.f32 %v399, %v401
      %v404 = vrot.slane %v378, 4
      %v406 = vadd.f32 %v402, %v404
      %v407 = vadd.f32 %v406, %v383
      %v409 = vrot.slane %v383, 4
      %411 = vrot.lane.b32.xlu0 %v409, 127
      %v412 = vpop.permute.xlu0 %411
      %v413 = vadd.f32 %v407, %v412
      %414 = vrot.lane.b32.xlu0 %v388, 119
      %v415 = vpop.permute.xlu0 %414
      %v416 = vadd.f32 %v413, %v415
      %v418 = vrot.slane %v388, 4
      %420 = vrot.lane.b32.xlu0 %v418, 119
      %v421 = vpop.permute.xlu0 %420
      %v422 = vadd.f32 %v416, %v421
      %423 = vrot.lane.b32.xlu0 %v393, 118
      %v424 = vpop.permute.xlu0 %423
      %v425 = vadd.f32 %v422, %v424
      %427 = vset.pattern.permute.xlu0 0
      %428 = vperm.xlu0 %427, %v286
      %v429 = vpop.permute.xlu0 %428
      %v431 = vadd.f32 %v425, %v429
      %v432 = vmax.f32 %v431, 0.0
      %v433 = vld [vmem:[%s272] sm:$0xff]
      %v434 = vld [vmem:[%s272 + $0x8] sm:$0xff]
      %435 = vmatprep.subr.mxu0 0.0
      %436 = vmatpush1.msra.mxu0 %v433
      %437 = vmatprep.subr.mxu0 0.0
      %438 = vmatpush1.msra.mxu0 %v434
      %439 = vmatprep.subr.mxu0 0.0
      %440 = vmatpush1.msra.mxu0 0.0
      %441 = vmatprep.subr.mxu0 0.0
      %442 = vmatpush1.msra.mxu0 0.0
      %443 = vmatprep.subr.mxu0 0.0
      %444 = vmatpush1.msra.mxu0 0.0
      %445 = vmatprep.subr.mxu0 0.0
      %446 = vmatpush1.msra.mxu0 0.0
      %447 = vmatprep.subr.mxu0 0.0
      %448 = vmatpush1.msra.mxu0 0.0
      %449 = vmatprep.subr.mxu0 0.0
      %450 = vmatpush1.msra.mxu0 0.0
      %451 = vmatprep.subr.mxu0 0.0
      %452 = vmatpush1.msra.mxu0 0.0
      %453 = vmatprep.subr.mxu0 0.0
      %454 = vmatpush1.msra.mxu0 0.0
      %455 = vmatprep.subr.mxu0 0.0
      %456 = vmatpush1.msra.mxu0 0.0
      %457 = vmatprep.subr.mxu0 0.0
      %458 = vmatpush1.msra.mxu0 0.0
      %459 = vmatprep.subr.mxu0 0.0
      %460 = vmatpush1.msra.mxu0 0.0
      %461 = vmatprep.subr.mxu0 0.0
      %462 = vmatpush1.msra.mxu0 0.0
      %463 = vmatprep.subr.mxu0 0.0
      %464 = vmatpush1.msra.mxu0 0.0
      %465 = vmatprep.subr.mxu0 0.0
      %466 = vmatpush1.msra.mxu0 0.0
      %467 = vmatprep.subr.mxu0 0.0
      %468 = vmatpush1.msra.mxu0 0.0
      %469 = vmatprep.subr.mxu0 0.0
      %470 = vmatpush1.msra.mxu0 0.0
      %471 = vmatprep.subr.mxu0 0.0
      %472 = vmatpush1.msra.mxu0 0.0
      %473 = vmatprep.subr.mxu0 0.0
      %474 = vmatpush1.msra.mxu0 0.0
      %475 = vmatprep.subr.mxu0 0.0
      %476 = vmatpush1.msra.mxu0 0.0
      %477 = vmatprep.subr.mxu0 0.0
      %478 = vmatpush1.msra.mxu0 0.0
      %479 = vmatprep.subr.mxu0 0.0
      %480 = vmatpush1.msra.mxu0 0.0
      %481 = vmatprep.subr.mxu0 0.0
      %482 = vmatpush1.msra.mxu0 0.0
      %483 = vmatprep.subr.mxu0 0.0
      %484 = vmatpush1.msra.mxu0 0.0
      %485 = vmatprep.subr.mxu0 0.0
      %486 = vmatpush1.msra.mxu0 0.0
      %487 = vmatprep.subr.mxu0 0.0
      %488 = vmatpush1.msra.mxu0 0.0
      %489 = vmatprep.subr.mxu0 0.0
      %490 = vmatpush1.msra.mxu0 0.0
      %491 = vmatprep.subr.mxu0 0.0
      %492 = vmatpush1.msra.mxu0 0.0
      %493 = vmatprep.subr.mxu0 0.0
      %494 = vmatpush1.msra.mxu0 0.0
      %495 = vmatprep.subr.mxu0 0.0
      %496 = vmatpush1.msra.mxu0 0.0
      %497 = vmatprep.subr.mxu0 0.0
      %498 = vmatpush1.msra.mxu0 0.0
      %499 = vmatprep.mubr.f32.mxu0 0.0
      %500 = vmatmul.mubr.f32.gmra.mrb[0].mxu0 %v292
      %v501 = vpop.f32.mrb[0].mxu0
      %v502 = vadd.f32 0.0, %v501
      %v503 = vpop.f32.mrb[0].mxu0
      %504 = vmatprep.mubr.f32.mxu0 0.0
      %505 = vmatmul.mubr.f32.gmra.mrb[0].mxu0 %v295
      %v506 = vpop.f32.mrb[0].mxu0
      %v507 = vadd.f32 0.0, %v506
      %v508 = vpop.f32.mrb[0].mxu0
      %509 = vmatprep.mubr.f32.mxu0 0.0
      %510 = vmatmul.mubr.f32.gmra.mrb[0].mxu0 %v298
      %v511 = vpop.f32.mrb[0].mxu0
      %v512 = vadd.f32 0.0, %v511
      %v513 = vpop.f32.mrb[0].mxu0
      %514 = vmatprep.mubr.f32.mxu0 0.0
      %515 = vmatmul.mubr.f32.gmra.mrb[0].mxu0 %v301
      %v516 = vpop.f32.mrb[0].mxu0
      %v517 = vadd.f32 0.0, %v516
      %v518 = vpop.f32.mrb[0].mxu0
      %519 = vmatprep.mubr.f32.mxu0 0.0
      %520 = vmatmul.mubr.f32.gmra.mrb[0].mxu0 %v304
      %v521 = vpop.f32.mrb[0].mxu0
      %v522 = vadd.f32 0.0, %v521
      %v523 = vpop.f32.mrb[0].mxu0
      %524 = vdwg.mxu0
      %v526 = vrot.slane %v502, 4
      %v528 = vadd.f32 %v502, %v526
      %529 = vrot.lane.b32.xlu0 %v507, 127
      %v530 = vpop.permute.xlu0 %529
      %v531 = vadd.f32 %v528, %v530
      %v533 = vrot.slane %v507, 4
      %v535 = vadd.f32 %v531, %v533
      %v536 = vadd.f32 %v535, %v512
      %v538 = vrot.slane %v512, 4
      %540 = vrot.lane.b32.xlu0 %v538, 127
      %v541 = vpop.permute.xlu0 %540
      %v542 = vadd.f32 %v536, %v541
      %543 = vrot.lane.b32.xlu0 %v517, 119
      %v544 = vpop.permute.xlu0 %543
      %v545 = vadd.f32 %v542, %v544
      %v547 = vrot.slane %v517, 4
      %549 = vrot.lane.b32.xlu0 %v547, 119
      %v550 = vpop.permute.xlu0 %549
      %v551 = vadd.f32 %v545, %v550
      %552 = vrot.lane.b32.xlu0 %v522, 118
      %v553 = vpop.permute.xlu0 %552
      %v554 = vadd.f32 %v551, %v553
      %v555 = vadd.f32 %v554, %v429
      %v556 = vmax.f32 %v555, 0.0
      %v558 = vlaneseq
      %v559 = vshrl.u32 %v558, 7
      %v560 = vsub.s32 0, %v559
      %v561 = vrot.slane %v287, %v560
      %v563 = vmul.f32 %v556, %v561
      %vm564 = vcmask 1043456
      %v565 = vsel %vm564, %v563, 0.0
      %566 = vadd.xlane.f32.xlu0 %v565
      %v567 = vpop.xlane.xlu0 %566
      %v568 = vmul.f32 %v563, %v563
      %v569 = vsel %vm564, %v568, 0.0
      %570 = vadd.xlane.f32.xlu0 %v569
      %v571 = vpop.xlane.xlu0 %570
      %v572 = vmul.f32 %v567, 0.015625
      %v573 = vmul.f32 %v567, %v572
      %v574 = vsub.f32 %v571, %v573
      %v575 = vmax.f32 %v574, 0.0
      %v576 = vmul.f32 %v575, 0.015873017
      %v577 = vmul.f32 %v432, %v561
      %v578 = vsel %vm564, %v577, 0.0
      %579 = vadd.xlane.f32.xlu0 %v578
      %v580 = vpop.xlane.xlu0 %579
      %v581 = vmul.f32 %v577, %v577
      %v582 = vsel %vm564, %v581, 0.0
      %583 = vadd.xlane.f32.xlu0 %v582
      %v584 = vpop.xlane.xlu0 %583
      %v585 = vmul.f32 %v580, 0.015625
      %v586 = vmul.f32 %v580, %v585
      %v587 = vsub.f32 %v584, %v586
      %v588 = vmax.f32 %v587, 0.0
      %v589 = vmul.f32 %v588, 0.015873017
      %v590 = vadd.f32 %v589, 1e-05
      %v591 = vrsqrt.pop %v590
      %v592 = vmul.f32 %v590, %v591
      %vm593 = vcmp.eq.f32.partialorder %v590, inf
      %v594 = vsel %vm593, %v590, %v592
      %vm595 = vcmp.eq.f32.partialorder %v590, 0.0
      %v596 = vand.u32 %v590, 2147483648
      %v597 = vsel %vm595, %v596, %v594
      %v598 = vadd.f32 %v576, 1e-05
      %v599 = vrsqrt.pop %v598
      %v600 = vmul.f32 %v597, %v599
      %v601 = vmul.f32 %v572, %v600
      %v602 = vsub.f32 %v585, %v601
      %603 = vst [vmem:[%s276] sm:$0xf] %v432
      %v604 = vmul.f32 %v556, %v600
      %v605 = vadd.f32 %v604, %v602
      %606 = vst [vmem:[%s280] sm:$0xf] %v605
      %p607 = scmp.lt.s32.totalorder %s18, 1
      %s608 = scalar_select %p607, %s18, 1
      %s609 = smul.addr %s608, 4
      %s610 = scalar_lea.vmem %s5, %s609
      %p611 = scmp.lt.s32.totalorder %s18, 1
      %s612 = scalar_select %p611, %s18, 1
      %s613 = smul.addr %s612, 4
      %s614 = scalar_lea.vmem %s6, %s613
      // Predicated region
      $region41: #{splat_block_forward.2} parent=39 // pred_check
        %p615 = pneg %p151
      $region42: #{splat_block_forward.2} parent=39 // pred_check_branch
        %617 = sbr.rel (%p615) target = $region44
      $region43: #{splat_block_forward.2} parent=39 // pred_region
        _
      $region44: #{splat_block_forward.2} parent=39 // pred_fallthru
        _
      // Predicated region
      $region45: #{splat_block_forward.2} parent=39 // pred_check
        %p618 = pneg %p177
      $region46: #{splat_block_forward.2} parent=39 // pred_check_branch
        %620 = sbr.rel (%p618) target = $region48
      $region47: #{splat_block_forward.2} parent=39 // pred_region
        _
      $region48: #{splat_block_forward.2} parent=39 // pred_fallthru
        _
    $region40: #{splat_block_forward.2} parent=5 // pred_fallthru
      _
    %p621 = scmp.le.s32.totalorder 2, %s13
    // Predicated region
    $region49: #{splat_block_forward.2} parent=5 // pred_check
      %p622 = pneg %p621
    $region50: #{splat_block_forward.2} parent=5 // pred_check_branch
      %624 = sbr.rel (%p622) target = $region52
    $region51: #{splat_block_forward.2} parent=5 // pred_region
      %s625 = ssub.s32 %s13, 2
      // Predicated region
      $region53: #{splat_block_forward.2} parent=51 // pred_check
        %p626 = pneg %p157
      $region54: #{splat_block_forward.2} parent=51 // pred_check_branch
        %628 = sbr.rel (%p626) target = $region56
      $region55: #{splat_block_forward.2} parent=51 // pred_region
        %p629 = scmp.lt.s32.totalorder %s19, 1
        %s630 = scalar_select %p629, %s19, 1
        %s631 = smul.addr %s630, 4
        %s632 = scalar_lea.vmem %s5, %s631
      $region56: #{splat_block_forward.2} parent=51 // pred_fallthru
        _
      // Predicated region
      $region57: #{splat_block_forward.2} parent=51 // pred_check
        %p633 = pneg %p183
      $region58: #{splat_block_forward.2} parent=51 // pred_check_branch
        %635 = sbr.rel (%p633) target = $region60
      $region59: #{splat_block_forward.2} parent=51 // pred_region
        %p636 = scmp.lt.s32.totalorder %s19, 1
        %s637 = scalar_select %p636, %s19, 1
        %s638 = smul.addr %s637, 4
        %s639 = scalar_lea.vmem %s6, %s638
      $region60: #{splat_block_forward.2} parent=51 // pred_fallthru
        _
    $region52: #{splat_block_forward.2} parent=5 // pred_fallthru
      _
  $region6: #{splat_block_forward.2} parent=0 // loop_footer
    %s17 = sadd.s32 1, %s13
  $region7: #{splat_block_forward.2} parent=0 // loop_footer_branch
    %12 = sbr.rel target = $region3
  $region8: #{splat_block_forward.2} parent=0 // loop_exit
    _

// kernel: splat_block_forward.3
$region0: #{splat_block_forward.3}
  #allocation0 [shape = 'u32[]', space=smem, size = 0x4, offset = 0x4, fixed_abs, tag = 'smem constant byte address 0x4 - core index']
  #allocation1 [shape = 'u32[144,128]{1,0:T(1,128)}', space=vmem, size = 0x12000, scoped, tag = 'internal scratch']
  %s0 = inlined_call_operand.vmem [shape: f32[36,4], index: 0, kind: input, shape index: {}]
  %s1 = inlined_call_operand.vmem [shape: f32[36,64], index: 1, kind: input, shape index: {}]
  %s2 = inlined_call_operand.vmem [shape: f32[4,1], index: 2, kind: input, shape index: {}]
  %s3 = inlined_call_operand.vmem [shape: f32[2,4,128], index: 3, kind: input, shape index: {}]
  %s4 = inlined_call_operand.vmem [shape: f32[2,64,128], index: 4, kind: input, shape index: {}]
  %s5 = inlined_call_operand.vmem [shape: f32[2,4,128], index: 5, kind: output, shape index: {}]
  %s6 = sld [smem:[#allocation0]]
  $region53: #{splat_block_forward.3} parent=0
    _
  %s8 = ssub.s32 1, %s6
  %s9 = scalar_select 0, %s8, %s6
  loop: start=0, step=1, limit=4
  $region2: #{splat_block_forward.3} parent=0 // loop_pre_header
    _
  $region3: #{splat_block_forward.3} parent=0 // loop_header
    %s11 = sphi 0, %s15
    %p12 = scmp.ge.s32.totalorder %s11, 4
    %s19 = sphi 0, %s19
    %s21 = sphi 0, %s19
    %s22 = sphi 0, %s21
    %s36 = sphi 0, %s22
    %s40 = sphi 0, %s40
    %s42 = sphi 0, %s40
    %s43 = sphi 0, %s42
    %s57 = sphi 0, %s43
    %s61 = sphi 0, %s61
    %s63 = sphi 0, %s61
    %s64 = sphi 0, %s63
    %s78 = sphi 0, %s64
    %s84 = sphi 0, %s86
    %s87 = sphi 0, %s84
    %s88 = sphi 0, %s87
    %s104 = sphi 0, %s88
    %s110 = sphi 0, %s112
    %s113 = sphi 0, %s110
    %s114 = sphi 0, %s113
    %s130 = sphi 0, %s114
    %s136 = sphi 0, %s138
    %s139 = sphi 0, %s136
    %s140 = sphi 0, %s139
    %s156 = sphi 0, %s140
  $region4: #{splat_block_forward.3} parent=0 // loop_header_branch
    %14 = sbr.rel (%p12) target = $region8
  $region5: #{splat_block_forward.3} parent=0 // loop_body
    %s16 = ssub.s32 %s11, 1
    %s17 = ssub.s32 %s11, 2
    %s18 = sadd.s32 %s11, 1
    %s20 = sadd.s32 %s19, 1
    %p23 = scmp.eq.s32.totalorder %s11, 1
    %p24 = scmp.ne.s32.totalorder %s19, %s21
    %p25 = scmp.eq.s32.totalorder %s11, 0
    %p26 = por %p24, %p25
    %p27 = scmp.ne.s32.totalorder %s19, %s21
    %p28 = scmp.eq.s32.totalorder %s16, 1
    %p29 = por %p27, %p28
    %p30 = scmp.ne.s32.totalorder %s21, %s22
    %p31 = scmp.eq.s32.totalorder %s16, 0
    %p32 = por %p30, %p31
    %p33 = scmp.ne.s32.totalorder %s21, %s22
    %p34 = scmp.eq.s32.totalorder %s17, 1
    %p35 = por %p33, %p34
    %p37 = scmp.ne.s32.totalorder %s22, %s36
    %p38 = scmp.eq.s32.totalorder %s17, 0
    %p39 = por %p37, %p38
    %s41 = sadd.s32 %s40, 1
    %p44 = scmp.eq.s32.totalorder %s11, 1
    %p45 = scmp.ne.s32.totalorder %s40, %s42
    %p46 = scmp.eq.s32.totalorder %s11, 0
    %p47 = por %p45, %p46
    %p48 = scmp.ne.s32.totalorder %s40, %s42
    %p49 = scmp.eq.s32.totalorder %s16, 1
    %p50 = por %p48, %p49
    %p51 = scmp.ne.s32.totalorder %s42, %s43
    %p52 = scmp.eq.s32.totalorder %s16, 0
    %p53 = por %p51, %p52
    %p54 = scmp.ne.s32.totalorder %s42, %s43
    %p55 = scmp.eq.s32.totalorder %s17, 1
    %p56 = por %p54, %p55
    %p58 = scmp.ne.s32.totalorder %s43, %s57
    %p59 = scmp.eq.s32.totalorder %s17, 0
    %p60 = por %p58, %p59
    %s62 = sadd.s32 %s61, 1
    %p65 = scmp.eq.s32.totalorder %s11, 1
    %p66 = scmp.ne.s32.totalorder %s61, %s63
    %p67 = scmp.eq.s32.totalorder %s11, 0
    %p68 = por %p66, %p67
    %p69 = scmp.ne.s32.totalorder %s61, %s63
    %p70 = scmp.eq.s32.totalorder %s16, 1
    %p71 = por %p69, %p70
    %p72 = scmp.ne.s32.totalorder %s63, %s64
    %p73 = scmp.eq.s32.totalorder %s16, 0
    %p74 = por %p72, %p73
    %p75 = scmp.ne.s32.totalorder %s63, %s64
    %p76 = scmp.eq.s32.totalorder %s17, 1
    %p77 = por %p75, %p76
    %p79 = scmp.ne.s32.totalorder %s64, %s78
    %p80 = scmp.eq.s32.totalorder %s17, 0
    %p81 = por %p79, %p80
    %s82 = ssub.s32 %s11, %s18
    %p83 = scmp.eq.s32.totalorder %s82, 0
    %s85 = sadd.s32 %s84, 1
    %s86 = scalar_select %p83, %s84, %s85
    %p89 = pneg %p83
    %p90 = scmp.eq.s32.totalorder %s11, 1
    %p91 = por %p89, %p90
    %p92 = scmp.ne.s32.totalorder %s84, %s87
    %p93 = scmp.eq.s32.totalorder %s11, 0
    %p94 = por %p92, %p93
    %p95 = scmp.ne.s32.totalorder %s84, %s87
    %p96 = scmp.eq.s32.totalorder %s16, 1
    %p97 = por %p95, %p96
    %p98 = scmp.ne.s32.totalorder %s87, %s88
    %p99 = scmp.eq.s32.totalorder %s16, 0
    %p100 = por %p98, %p99
    %p101 = scmp.ne.s32.totalorder %s87, %s88
    %p102 = scmp.eq.s32.totalorder %s17, 1
    %p103 = por %p101, %p102
    %p105 = scmp.ne.s32.totalorder %s88, %s104
    %p106 = scmp.eq.s32.totalorder %s17, 0
    %p107 = por %p105, %p106
    %s108 = ssub.s32 %s11, %s18
    %p109 = scmp.eq.s32.totalorder %s108, 0
    %s111 = sadd.s32 %s110, 1
    %s112 = scalar_select %p109, %s110, %s111
    %p115 = pneg %p109
    %p116 = scmp.eq.s32.totalorder %s11, 1
    %p117 = por %p115, %p116
    %p118 = scmp.ne.s32.totalorder %s110, %s113
    %p119 = scmp.eq.s32.totalorder %s11, 0
    %p120 = por %p118, %p119
    %p121 = scmp.ne.s32.totalorder %s110, %s113
    %p122 = scmp.eq.s32.totalorder %s16, 1
    %p123 = por %p121, %p122
    %p124 = scmp.ne.s32.totalorder %s113, %s114
    %p125 = scmp.eq.s32.totalorder %s16, 0
    %p126 = por %p124, %p125
    %p127 = scmp.ne.s32.totalorder %s113, %s114
    %p128 = scmp.eq.s32.totalorder %s17, 1
    %p129 = por %p127, %p128
    %p131 = scmp.ne.s32.totalorder %s114, %s130
    %p132 = scmp.eq.s32.totalorder %s17, 0
    %p133 = por %p131, %p132
    %s134 = ssub.s32 %s11, %s18
    %p135 = scmp.eq.s32.totalorder %s134, 0
    %s137 = sadd.s32 %s136, 1
    %s138 = scalar_select %p135, %s136, %s137
    %p141 = pneg %p135
    %p142 = scmp.eq.s32.totalorder %s11, 1
    %p143 = por %p141, %p142
    %p144 = scmp.ne.s32.totalorder %s136, %s139
    %p145 = scmp.eq.s32.totalorder %s11, 0
    %p146 = por %p144, %p145
    %p147 = scmp.ne.s32.totalorder %s136, %s139
    %p148 = scmp.eq.s32.totalorder %s16, 1
    %p149 = por %p147, %p148
    %p150 = scmp.ne.s32.totalorder %s139, %s140
    %p151 = scmp.eq.s32.totalorder %s16, 0
    %p152 = por %p150, %p151
    %p153 = scmp.ne.s32.totalorder %s139, %s140
    %p154 = scmp.eq.s32.totalorder %s17, 1
    %p155 = por %p153, %p154
    %p157 = scmp.ne.s32.totalorder %s140, %s156
    %p158 = scmp.eq.s32.totalorder %s17, 0
    %p159 = por %p157, %p158
    %p160 = scmp.le.s32.totalorder 1, %s11
    %p161 = scmp.lt.s32.totalorder %s11, 3
    %p162 = pnand %p160, %p161
    %p163 = pneg %p162
    // Predicated region
    $region9: #{splat_block_forward.3} parent=5 // pred_check
      _
    $region10: #{splat_block_forward.3} parent=5 // pred_check_branch
      %165 = sbr.rel (%p162) target = $region12
    $region11: #{splat_block_forward.3} parent=5 // pred_region
      %s166 = ssub.s32 %s11, 1
      // Predicated region
      $region13: #{splat_block_forward.3} parent=11 // pred_check
        %p167 = pneg %p32
      $region14: #{splat_block_forward.3} parent=11 // pred_check_branch
        %169 = sbr.rel (%p167) target = $region16
      $region15: #{splat_block_forward.3} parent=11 // pred_region
        _
      $region16: #{splat_block_forward.3} parent=11 // pred_fallthru
        _
      // Predicated region
      $region17: #{splat_block_forward.3} parent=11 // pred_check
        %p170 = pneg %p53
      $region18: #{splat_block_forward.3} parent=11 // pred_check_branch
        %172 = sbr.rel (%p170) target = $region20
      $region19: #{splat_block_forward.3} parent=11 // pred_region
        _
      $region20: #{splat_block_forward.3} parent=11 // pred_fallthru
        _
      // Predicated region
      $region21: #{splat_block_forward.3} parent=11 // pred_check
        %p173 = pneg %p74
      $region22: #{splat_block_forward.3} parent=11 // pred_check_branch
        %175 = sbr.rel (%p173) target = $region24
      $region23: #{splat_block_forward.3} parent=11 // pred_region
        _
      $region24: #{splat_block_forward.3} parent=11 // pred_fallthru
        _
    $region12: #{splat_block_forward.3} parent=5 // pred_fallthru
      _
    %p176 = scmp.lt.s32.totalorder %s11, 2
    // Predicated region
    $region25: #{splat_block_forward.3} parent=5 // pred_check
      %p177 = pneg %p176
    $region26: #{splat_block_forward.3} parent=5 // pred_check_branch
      %179 = sbr.rel (%p177) target = $region28
    $region27: #{splat_block_forward.3} parent=5 // pred_region
      // Predicated region
      $region29: #{splat_block_forward.3} parent=27 // pred_check
        %p180 = pneg %p94
      $region30: #{splat_block_forward.3} parent=27 // pred_check_branch
        %182 = sbr.rel (%p180) target = $region32
      $region31: #{splat_block_forward.3} parent=27 // pred_region
        %p183 = scmp.lt.s32.totalorder %s11, 1
        %s184 = scalar_select %p183, %s11, 1
        %s185 = smul.addr %s184, 4
        %s186 = scalar_lea.vmem %s3, %s185
      $region32: #{splat_block_forward.3} parent=27 // pred_fallthru
        _
      // Predicated region
      $region33: #{splat_block_forward.3} parent=27 // pred_check
        %p187 = pneg %p120
      $region34: #{splat_block_forward.3} parent=27 // pred_check_branch
        %189 = sbr.rel (%p187) target = $region36
      $region35: #{splat_block_forward.3} parent=27 // pred_region
        %p190 = scmp.lt.s32.totalorder %s11, 1
        %s191 = scalar_select %p190, %s11, 1
        %s192 = smul.addr %s191, 8
        %s193 = smul.addr %s192, 8
        %s194 = scalar_lea.vmem %s4, %s193
      $region36: #{splat_block_forward.3} parent=27 // pred_fallthru
        _
    $region28: #{splat_block_forward.3} parent=5 // pred_fallthru
      _
    %p195 = scmp.le.s32.totalorder 1, %s11
    %p196 = scmp.lt.s32.totalorder %s11, 3
    %p197 = pnand %p195, %p196
    %p198 = pneg %p197
    // Predicated region
    $region37: #{splat_block_forward.3} parent=5 // pred_check
      _
    $region38: #{splat_block_forward.3} parent=5 // pred_check_branch
      %200 = sbr.rel (%p197) target = $region40
    $region39: #{splat_block_forward.3} parent=5 // pred_region
      %s201 = ssub.s32 %s11, 1
      %p202 = pneg %p32
      %p203 = pneg %p29
      %p204 = pneg %p53
      %p205 = pneg %p50
      %p206 = pneg %p74
      %p207 = pneg %p71
      %p208 = scmp.lt.s32.totalorder %s16, 1
      %s209 = scalar_select %p208, %s16, 1
      %s210 = smul.addr %s209, 4
      %s211 = scalar_lea.vmem %s3, %s210
      %p212 = pneg %p100
      %p213 = pneg %p97
      %p214 = scmp.lt.s32.totalorder %s16, 1
      %s215 = scalar_select %p214, %s16, 1
      %s216 = smul.addr %s215, 8
      %s217 = smul.addr %s216, 8
      %s218 = scalar_lea.vmem %s4, %s217
      %p219 = pneg %p126
      %p220 = pneg %p123
      %p221 = pneg %p152
      %p222 = pneg %p149
      %p223 = scmp.lt.s32.totalorder %s16, 1
      %s224 = scalar_select %p223, %s16, 1
      %s225 = smul.addr %s224, 4
      %s226 = scalar_lea.vmem %s5, %s225
      %p227 = scmp.lt.s32.totalorder %s16, 1
      %s228 = scalar_select %p227, %s16, 1
      %s229 = smul.addr %s228, 4
      %s230 = scalar_lea.vmem %s3, %s229
      %p231 = scmp.lt.s32.totalorder %s16, 1
      %s232 = scalar_select %p231, %s16, 1
      %s233 = smul.addr %s232, 8
      %s234 = smul.addr %s233, 8
      %s235 = scalar_lea.vmem %s4, %s234
      %p236 = scmp.lt.s32.totalorder %s16, 1
      %s237 = scalar_select %p236, %s16, 1
      %s238 = smul.addr %s237, 4
      %s239 = scalar_lea.vmem %s5, %s238
      %v240 = vld [vmem:[%s0] sm:$0xff]
      %v241 = vld [vmem:[%s0 + $0x8] sm:$0xff]
      %v242 = vld [vmem:[%s0 + $0x10] sm:$0xff]
      %v243 = vld [vmem:[%s0 + $0x18] sm:$0xff]
      %v244 = vld [vmem:[%s0 + $0x20] sm:$0xf]
      %v245 = vld [vmem:[%s230] sm:$0xf]
      %v246 = vld [vmem:[%s1] sm:$0xff]
      %v247 = vld [vmem:[%s1 + $0x8] sm:$0xff]
      %v248 = vld [vmem:[%s1 + $0x10] sm:$0xff]
      %v249 = vld [vmem:[%s1 + $0x18] sm:$0xff]
      %v250 = vld [vmem:[%s1 + $0x20] sm:$0xf]
      %v251 = vld [vmem:[%s235] sm:$0xff]
      %v252 = vld [vmem:[%s235 + $0x8] sm:$0xff]
      %v253 = vld [vmem:[%s235 + $0x10] sm:$0xff]
      %v254 = vld [vmem:[%s235 + $0x18] sm:$0xff]
      %v255 = vld [vmem:[%s235 + $0x20] sm:$0xff]
      %v256 = vld [vmem:[%s235 + $0x28] sm:$0xff]
      %v257 = vld [vmem:[%s235 + $0x30] sm:$0xff]
      %v258 = vld [vmem:[%s235 + $0x38] sm:$0xff]
      %vm259 = vcmask 523264
      %v261 = vsel %vm259, %v246, 0
      %v264 = vsel %vm259, %v247, 0
      %v267 = vsel %vm259, %v248, 0
      %v270 = vsel %vm259, %v249, 0
      %v273 = vsel %vm259, %v250, 0
      %275 = vmatprep.subr.mxu0 0.0
      %276 = vmatpush1.msra.mxu0 %v251
      %277 = vmatprep.subr.mxu0 0.0
      %278 = vmatpush1.msra.mxu0 %v252
      %279 = vmatprep.subr.mxu0 0.0
      %280 = vmatpush1.msra.mxu0 %v253
      %281 = vmatprep.subr.mxu0 0.0
      %282 = vmatpush1.msra.mxu0 %v254
      %283 = vmatprep.subr.mxu0 0.0
      %284 = vmatpush1.msra.mxu0 %v255
      %285 = vmatprep.subr.mxu0 0.0
      %286 = vmatpush1.msra.mxu0 %v256
      %287 = vmatprep.subr.mxu0 0.0
      %288 = vmatpush1.msra.mxu0 %v257
      %289 = vmatprep.subr.mxu0 0.0
      %290 = vmatpush1.msra.mxu0 %v258
      %291 = vmatprep.subr.mxu0 0.0
      %292 = vmatpush1.msra.mxu0 0.0
      %293 = vmatprep.subr.mxu0 0.0
      %294 = vmatpush1.msra.mxu0 0.0
      %295 = vmatprep.subr.mxu0 0.0
      %296 = vmatpush1.msra.mxu0 0.0
      %297 = vmatprep.subr.mxu0 0.0
      %298 = vmatpush1.msra.mxu0 0.0
      %299 = vmatprep.subr.mxu0 0.0
      %300 = vmatpush1.msra.mxu0 0.0
      %301 = vmatprep.subr.mxu0 0.0
      %302 = vmatpush1.msra.mxu0 0.0
      %303 = vmatprep.subr.mxu0 0.0
      %304 = vmatpush1.msra.mxu0 0.0
      %305 = vmatprep.subr.mxu0 0.0
      %306 = vmatpush1.msra.mxu0 0.0
      %307 = vmatprep.subr.mxu0 0.0
      %308 = vmatpush1.msra.mxu0 0.0
      %309 = vmatprep.subr.mxu0 0.0
      %310 = vmatpush1.msra.mxu0 0.0
      %311 = vmatprep.subr.mxu0 0.0
      %312 = vmatpush1.msra.mxu0 0.0
      %313 = vmatprep.subr.mxu0 0.0
      %314 = vmatpush1.msra.mxu0 0.0
      %315 = vmatprep.subr.mxu0 0.0
      %316 = vmatpush1.msra.mxu0 0.0
      %317 = vmatprep.subr.mxu0 0.0
      %318 = vmatpush1.msra.mxu0 0.0
      %319 = vmatprep.subr.mxu0 0.0
      %320 = vmatpush1.msra.mxu0 0.0
      %321 = vmatprep.subr.mxu0 0.0
      %322 = vmatpush1.msra.mxu0 0.0
      %323 = vmatprep.subr.mxu0 0.0
      %324 = vmatpush1.msra.mxu0 0.0
      %325 = vmatprep.subr.mxu0 0.0
      %326 = vmatpush1.msra.mxu0 0.0
      %327 = vmatprep.subr.mxu0 0.0
      %328 = vmatpush1.msra.mxu0 0.0
      %329 = vmatprep.subr.mxu0 0.0
      %330 = vmatpush1.msra.mxu0 0.0
      %331 = vmatprep.subr.mxu0 0.0
      %332 = vmatpush1.msra.mxu0 0.0
      %333 = vmatprep.subr.mxu0 0.0
      %334 = vmatpush1.msra.mxu0 0.0
      %335 = vmatprep.subr.mxu0 0.0
      %336 = vmatpush1.msra.mxu0 0.0
      %337 = vmatprep.subr.mxu0 0.0
      %338 = vmatpush1.msra.mxu0 0.0
      %339 = vmatprep.mubr.f32.mxu0 0.0
      %340 = vmatmul.mubr.f32.gmra.mrb[0].mxu0 %v261
      %v341 = vpop.f32.mrb[0].mxu0
      %v342 = vadd.f32 0.0, %v341
      %v343 = vpop.f32.mrb[0].mxu0
      %344 = vmatprep.mubr.f32.mxu0 0.0
      %345 = vmatmul.mubr.f32.gmra.mrb[0].mxu0 %v264
      %v346 = vpop.f32.mrb[0].mxu0
      %v347 = vadd.f32 0.0, %v346
      %v348 = vpop.f32.mrb[0].mxu0
      %349 = vmatprep.mubr.f32.mxu0 0.0
      %350 = vmatmul.mubr.f32.gmra.mrb[0].mxu0 %v267
      %v351 = vpop.f32.mrb[0].mxu0
      %v352 = vadd.f32 0.0, %v351
      %v353 = vpop.f32.mrb[0].mxu0
      %354 = vmatprep.mubr.f32.mxu0 0.0
      %355 = vmatmul.mubr.f32.gmra.mrb[0].mxu0 %v270
      %v356 = vpop.f32.mrb[0].mxu0
      %v357 = vadd.f32 0.0, %v356
      %v358 = vpop.f32.mrb[0].mxu0
      %359 = vmatprep.mubr.f32.mxu0 0.0
      %360 = vmatmul.mubr.f32.gmra.mrb[0].mxu0 %v273
      %v361 = vpop.f32.mrb[0].mxu0
      %v362 = vadd.f32 0.0, %v361
      %v363 = vpop.f32.mrb[0].mxu0
      %364 = vdwg.mxu0
      %vm365 = vcmask 31744
      %v367 = vsel %vm365, %v240, 0
      %v370 = vsel %vm365, %v241, 0
      %v373 = vsel %vm365, %v242, 0
      %v376 = vsel %vm365, %v243, 0
      %v379 = vsel %vm365, %v244, 0
      %vm381 = vcmask 1043456
      %v383 = vsel %vm381, %v245, 0
      %385 = vmatprep.subr.mxu0 0.0
      %386 = vmatpush1.msra.mxu0 %v383
      %387 = vmatprep.subr.mxu0 0.0
      %388 = vmatpush1.msra.mxu0 0.0
      %389 = vmatprep.subr.mxu0 0.0
      %390 = vmatpush1.msra.mxu0 0.0
      %391 = vmatprep.subr.mxu0 0.0
      %392 = vmatpush1.msra.mxu0 0.0
      %393 = vmatprep.subr.mxu0 0.0
      %394 = vmatpush1.msra.mxu0 0.0
      %395 = vmatprep.subr.mxu0 0.0
      %396 = vmatpush1.msra.mxu0 0.0
      %397 = vmatprep.subr.mxu0 0.0
      %398 = vmatpush1.msra.mxu0 0.0
      %399 = vmatprep.subr.mxu0 0.0
      %400 = vmatpush1.msra.mxu0 0.0
      %401 = vmatprep.subr.mxu0 0.0
      %402 = vmatpush1.msra.mxu0 0.0
      %403 = vmatprep.subr.mxu0 0.0
      %404 = vmatpush1.msra.mxu0 0.0
      %405 = vmatprep.subr.mxu0 0.0
      %406 = vmatpush1.msra.mxu0 0.0
      %407 = vmatprep.subr.mxu0 0.0
      %408 = vmatpush1.msra.mxu0 0.0
      %409 = vmatprep.subr.mxu0 0.0
      %410 = vmatpush1.msra.mxu0 0.0
      %411 = vmatprep.subr.mxu0 0.0
      %412 = vmatpush1.msra.mxu0 0.0
      %413 = vmatprep.subr.mxu0 0.0
      %414 = vmatpush1.msra.mxu0 0.0
      %415 = vmatprep.subr.mxu0 0.0
      %416 = vmatpush1.msra.mxu0 0.0
      %417 = vmatprep.subr.mxu0 0.0
      %418 = vmatpush1.msra.mxu0 0.0
      %419 = vmatprep.subr.mxu0 0.0
      %420 = vmatpush1.msra.mxu0 0.0
      %421 = vmatprep.subr.mxu0 0.0
      %422 = vmatpush1.msra.mxu0 0.0
      %423 = vmatprep.subr.mxu0 0.0
      %424 = vmatpush1.msra.mxu0 0.0
      %425 = vmatprep.subr.mxu0 0.0
      %426 = vmatpush1.msra.mxu0 0.0
      %427 = vmatprep.subr.mxu0 0.0
      %428 = vmatpush1.msra.mxu0 0.0
      %429 = vmatprep.subr.mxu0 0.0
      %430 = vmatpush1.msra.mxu0 0.0
      %431 = vmatprep.subr.mxu0 0.0
      %432 = vmatpush1.msra.mxu0 0.0
      %433 = vmatprep.subr.mxu0 0.0
      %434 = vmatpush1.msra.mxu0 0.0
      %435 = vmatprep.subr.mxu0 0.0
      %436 = vmatpush1.msra.mxu0 0.0
      %437 = vmatprep.subr.mxu0 0.0
      %438 = vmatpush1.msra.mxu0 0.0
      %439 = vmatprep.subr.mxu0 0.0
      %440 = vmatpush1.msra.mxu0 0.0
      %441 = vmatprep.subr.mxu0 0.0
      %442 = vmatpush1.msra.mxu0 0.0
      %443 = vmatprep.subr.mxu0 0.0
      %444 = vmatpush1.msra.mxu0 0.0
      %445 = vmatprep.subr.mxu0 0.0
      %446 = vmatpush1.msra.mxu0 0.0
      %447 = vmatprep.subr.mxu0 0.0
      %448 = vmatpush1.msra.mxu0 0.0
      %449 = vmatprep.mubr.f32.mxu0 0.0
      %450 = vmatmul.mubr.f32.gmra.mrb[0].mxu0 %v367
      %v451 = vpop.f32.mrb[0].mxu0
      %v452 = vadd.f32 %v342, %v451
      %v453 = vpop.f32.mrb[0].mxu0
      %454 = vmatprep.mubr.f32.mxu0 0.0
      %455 = vmatmul.mubr.f32.gmra.mrb[0].mxu0 %v370
      %v456 = vpop.f32.mrb[0].mxu0
      %v457 = vadd.f32 %v347, %v456
      %v458 = vpop.f32.mrb[0].mxu0
      %459 = vmatprep.mubr.f32.mxu0 0.0
      %460 = vmatmul.mubr.f32.gmra.mrb[0].mxu0 %v373
      %v461 = vpop.f32.mrb[0].mxu0
      %v462 = vadd.f32 %v352, %v461
      %v463 = vpop.f32.mrb[0].mxu0
      %464 = vmatprep.mubr.f32.mxu0 0.0
      %465 = vmatmul.mubr.f32.gmra.mrb[0].mxu0 %v376
      %v466 = vpop.f32.mrb[0].mxu0
      %v467 = vadd.f32 %v357, %v466
      %v468 = vpop.f32.mrb[0].mxu0
      %469 = vmatprep.mubr.f32.mxu0 0.0
      %470 = vmatmul.mubr.f32.gmra.mrb[0].mxu0 %v379
      %v471 = vpop.f32.mrb[0].mxu0
      %v472 = vadd.f32 %v362, %v471
      %v473 = vpop.f32.mrb[0].mxu0
      %474 = vdwg.mxu0
      %v476 = vrot.slane %v452, 4
      %478 = vrot.lane.b32.xlu0 %v476, 127
      %v479 = vpop.permute.xlu0 %478
      %v480 = vadd.f32 %v452, %v479
      %481 = vrot.lane.b32.xlu0 %v457, 126
      %v482 = vpop.permute.xlu0 %481
      %v483 = vadd.f32 %v480, %v482
      %v485 = vrot.slane %v457, 4
      %487 = vrot.lane.b32.xlu0 %v485, 118
      %v488 = vpop.permute.xlu0 %487
      %v489 = vadd.f32 %v483, %v488
      %490 = vrot.lane.b32.xlu0 %v462, 117
      %v491 = vpop.permute.xlu0 %490
      %v492 = vadd.f32 %v489, %v491
      %v494 = vrot.slane %v462, 4
      %496 = vrot.lane.b32.xlu0 %v494, 116
      %v497 = vpop.permute.xlu0 %496
      %v498 = vadd.f32 %v492, %v497
      %499 = vrot.lane.b32.xlu0 %v467, 108
      %v500 = vpop.permute.xlu0 %499
      %v501 = vadd.f32 %v498, %v500
      %v503 = vrot.slane %v467, 4
      %505 = vrot.lane.b32.xlu0 %v503, 107
      %v506 = vpop.permute.xlu0 %505
      %v507 = vadd.f32 %v501, %v506
      %508 = vrot.lane.b32.xlu0 %v472, 106
      %v509 = vpop.permute.xlu0 %508
      %v510 = vadd.f32 %v507, %v509
      %v511 = vld [vmem:[%s2] sm:$0xf]
      %513 = vset.pattern.permute.xlu0 0
      %514 = vperm.xlu0 %513, %v511
      %v515 = vpop.permute.xlu0 %514
      %v517 = vadd.f32 %v510, %v515
      %v518 = vmax.f32 %v517, 0.0
      %519 = vst [vmem:[%s239] sm:$0xf] %v518
      %p520 = scmp.lt.s32.totalorder %s16, 1
      %s521 = scalar_select %p520, %s16, 1
      %s522 = smul.addr %s521, 4
      %s523 = scalar_lea.vmem %s5, %s522
      // Predicated region
      $region41: #{splat_block_forward.3} parent=39 // pred_check
        %p524 = pneg %p149
      $region42: #{splat_block_forward.3} parent=39 // pred_check_branch
        %526 = sbr.rel (%p524) target = $region44
      $region43: #{splat_block_forward.3} parent=39 // pred_region
        _
      $region44: #{splat_block_forward.3} parent=39 // pred_fallthru
        _
    $region40: #{splat_block_forward.3} parent=5 // pred_fallthru
      _
    %p527 = scmp.le.s32.totalorder 2, %s11
    // Predicated region
    $region45: #{splat_block_forward.3} parent=5 // pred_check
      %p528 = pneg %p527
    $region46: #{splat_block_forward.3} parent=5 // pred_check_branch
      %530 = sbr.rel (%p528) target = $region48
    $region47: #{splat_block_forward.3} parent=5 // pred_region
      %s531 = ssub.s32 %s11, 2
      // Predicated region
      $region49: #{splat_block_forward.3} parent=47 // pred_check
        %p532 = pneg %p155
      $region50: #{splat_block_forward.3} parent=47 // pred_check_branch
        %534 = sbr.rel (%p532) target = $region52
      $region51: #{splat_block_forward.3} parent=47 // pred_region
        %p535 = scmp.lt.s32.totalorder %s17, 1
        %s536 = scalar_select %p535, %s17, 1
        %s537 = smul.addr %s536, 4
        %s538 = scalar_lea.vmem %s5, %s537
      $region52: #{splat_block_forward.3} parent=47 // pred_fallthru
        _
    $region48: #{splat_block_forward.3} parent=5 // pred_fallthru
      _
  $region6: #{splat_block_forward.3} parent=0 // loop_footer
    %s15 = sadd.s32 1, %s11
  $region7: #{splat_block_forward.3} parent=0 // loop_footer_branch
    %10 = sbr.rel target = $region3
  $region8: #{splat_block_forward.3} parent=0 // loop_exit
    _

</llo_original>
